<compile_context>
chip_gen: v5e
topology: v5e:2x2
jax: 0.10.0
libtpu: 0.0.40
codegen_flags: <defaults>
</compile_context>

<pallas_src>
import functools

import jax
import jax.numpy as jnp
from jax.experimental import pallas as pl
from jax.experimental.pallas import tpu as pltpu

BN_EPS = 1e-5
# Chunk d_ff only once the bf16 weights exceed this budget (per review: the per-grid-step
# overhead outweighs the trivially-hidden weight DMA below a few MiB).
_WEIGHT_VMEM_BUDGET = 4 * 1024 * 1024
# Explicit VMEM budget: safe on v7x (64 MiB physical), larger than the 32 MiB scoped default.
_VMEM_LIMIT_BYTES = 48 * 1024 * 1024


# ----------------------------- in-kernel helpers -----------------------------

def _gelu(x):
    # tanh-form GELU: the transcendental goes to the EUP slot, only a few VALU ops.
    c = 0.7978845608028654  # sqrt(2/pi)
    return 0.5 * x * (1.0 + jnp.tanh(c * (x + 0.044715 * (x * x * x))))


def _attn_residual_into(x_ref, src_ref, qp_ref, kp_ref, scale):
    """Element-wise 'attention' + residual, written straight into the halves of x_ref."""
    h = src_ref.shape[0] // 2
    q_re = qp_ref[:h, :]
    q_im = qp_ref[h:, :]
    k_re = kp_ref[:h, :]
    k_im = kp_ref[h:, :]
    v = q_re                                   # reference: v_re = v_im = v[:bs//2]
    s_re = scale * (q_re * k_re - q_im * k_im)
    s_im = scale * (q_re * k_im - q_im * k_re)  # minus sign as in reference
    x_ref[:h, :] = src_ref[:h, :] + (s_re - s_im) * v   # output_real + residual
    x_ref[h:, :] = src_ref[h:, :] + (s_re + s_im) * v   # output_imag + residual


def _batchnorm(x, gamma, beta):
    mean = jnp.mean(x, axis=0, keepdims=True)
    d = x - mean
    var = jnp.mean(d * d, axis=0, keepdims=True)
    return d * jax.lax.rsqrt(var + BN_EPS) * gamma + beta


# ------------------------- fused layer kernel (no d_ff grid) -------------------------

def _layer_kernel_fused(scale,
                        src_ref, qp_ref, kp_ref,
                        g1_ref, be1_ref,
                        w1_ref, b1_ref, w2_ref, b2_ref,
                        g2_ref, be2_ref,
                        out_ref,
                        x_ref):
    """One TSTEncoderLayer forward in a single invocation (weights fully resident)."""
    _attn_residual_into(x_ref, src_ref, qp_ref, kp_ref, scale)
    x = _batchnorm(x_ref[...], g1_ref[...], be1_ref[...])        # BN1 output (f32)

    # feed-forward: Linear -> GELU -> Linear ; bf16 MXU operands, f32 accumulation
    hid = jnp.dot(x.astype(w1_ref.dtype), w1_ref[...],
                  preferred_element_type=jnp.float32) + b1_ref[...]
    hid = _gelu(hid)
    ff = jnp.dot(hid.astype(w2_ref.dtype), w2_ref[...],
                 preferred_element_type=jnp.float32) + b2_ref[...]

    x2 = x + ff                                                   # residual add
    out_ref[...] = _batchnorm(x2, g2_ref[...], be2_ref[...]).astype(out_ref.dtype)


# --------------------- chunked layer kernel (grid over d_ff chunks) ---------------------

def _layer_kernel_chunked(scale,
                          src_ref, qp_ref, kp_ref,
                          g1_ref, be1_ref,
                          w1_ref, b1_ref, w2_ref, b2_ref,
                          g2_ref, be2_ref,
                          out_ref,
                          x_ref, xb_ref, acc_ref):
    """Same layer, grid axis = d_ff chunks (reduction, 'arbitrary').

    x_ref  : VMEM scratch, f32 BN1 output (resident; used for the final residual).
    xb_ref : VMEM scratch, bf16 copy of the BN1 output (matmul LHS, cast exactly once).
    acc_ref: VMEM scratch accumulating the second FF matmul in f32.
    """
    j = pl.program_id(0)

    @pl.when(j == 0)
    def _init():
        _attn_residual_into(x_ref, src_ref, qp_ref, kp_ref, scale)
        xn = _batchnorm(x_ref[...], g1_ref[...], be1_ref[...])
        x_ref[...] = xn
        xb_ref[...] = xn.astype(xb_ref.dtype)

    # hid_j = gelu(x @ W1[:, j] + b1[j]);  acc (+)= hid_j @ W2[j, :]
    hid = jnp.dot(xb_ref[...], w1_ref[...],
                  preferred_element_type=jnp.float32) + b1_ref[...]
    hid = _gelu(hid)
    part = jnp.dot(hid.astype(w2_ref.dtype), w2_ref[...],
                   preferred_element_type=jnp.float32)

    @pl.when(j == 0)
    def _first():
        acc_ref[...] = part      # direct assign: no zero-fill + add on the first chunk

    @pl.when(j > 0)
    def _rest():
        acc_ref[...] += part

    @pl.when(j == pl.num_programs(0) - 1)
    def _final():
        x2 = x_ref[...] + acc_ref[...] + b2_ref[...]              # residual add
        out_ref[...] = _batchnorm(x2, g2_ref[...], be2_ref[...]).astype(out_ref.dtype)


# ------------------------------ wrappers (glue) --------------------------------

def _ff_tile(d_model, d_ff, bytes_per_elem=2):
    """VMEM-budget-driven d_ff tiling: no chunking unless bf16 W1+W2 exceed the budget."""
    if 2 * d_model * d_ff * bytes_per_elem <= _WEIGHT_VMEM_BUDGET:
        return d_ff
    for t in (1024, 512, 256, 128):
        if d_ff % t == 0:
            return t
    return d_ff


def tst_encoder_layer_forward(src, p, *, compute_dtype=jnp.bfloat16):
    """TSTEncoderLayer.forward (pre_norm=False, BatchNorm, dropout=0) — one fused kernel."""
    bs, L, D = src.shape
    assert bs % 2 == 0, "batch must be even (re/im split of the reference)"
    N = bs * L
    assert (N // 2) % 8 == 0, "bs*seq_len/2 must be a multiple of 8 (sublane alignment)"
    d_ff = p["w1"].shape[1]
    t_ff = _ff_tile(D, d_ff)
    n_steps = d_ff // t_ff

    # XLA glue (cheap fused gathers on tiny tensors): pre-apply
    #   (a) torch.flip(K, dims=[1,2])  and
    #   (b) the post-attention transpose(1,2).view(bs,-1,D) scramble
    # to the *inputs* of the purely element-wise attention, so the kernel stays reshape-free.
    def perm(x):
        return jnp.transpose(x, (0, 2, 1)).reshape(bs, L, D)

    qp = perm(src).reshape(N, D)
    kp = perm(jnp.flip(src, axis=(1, 2))).reshape(N, D)
    s2d = src.reshape(N, D)

    w1 = p["w1"].astype(compute_dtype)
    w2 = p["w2"].astype(compute_dtype)

    # Resident-VMEM estimate, gated against the explicit budget (v7x-safe).
    act = N * D * 4
    if n_steps == 1:
        est = 5 * act + 2 * (D * d_ff + d_ff * D) * 2
    else:
        est = 7 * act + N * D * 2 + 4 * (D * t_ff + t_ff * D) * 2
    assert est < _VMEM_LIMIT_BYTES, (
        "activation set too large for the single-pass BatchNorm path"
    )  # TODO(synk): row-tiled two-pass BN for very large N.

    args = (s2d, qp, kp,
            p["bn1_gamma"], p["bn1_beta"],
            w1, p["b1"], w2, p["b2"],
            p["bn2_gamma"], p["bn2_beta"])

    if n_steps == 1:
        # Fully fused single invocation: whole arrays resident in VMEM, no pipelining.
        out2d = pl.pallas_call(
            functools.partial(_layer_kernel_fused, p["scale"]),
            out_shape=jax.ShapeDtypeStruct((N, D), src.dtype),
            scratch_shapes=[pltpu.VMEM((N, D), jnp.float32)],   # attn+residual / BN1 staging
            compiler_params=pltpu.CompilerParams(
                vmem_limit_bytes=_VMEM_LIMIT_BYTES),
        )(*args)
    else:
        # Block-invariant inputs: single-buffered (their block index never changes).
        def const_spec(shape):
            n = len(shape)
            return pl.BlockSpec(shape, lambda j, _n=n: (0,) * _n,
                                pipeline_mode=pl.Buffered(1))

        # W1/b1/W2 chunks keep default double-buffering (the only data that moves with j).
        # On v5e (lower HBM BW) consider pl.Buffered(3) here if the weight DMA is exposed.
        out2d = pl.pallas_call(
            functools.partial(_layer_kernel_chunked, p["scale"]),
            out_shape=jax.ShapeDtypeStruct((N, D), src.dtype),
            grid=(n_steps,),
            in_specs=[
                const_spec((N, D)), const_spec((N, D)), const_spec((N, D)),
                const_spec((1, D)), const_spec((1, D)),
                pl.BlockSpec((D, t_ff), lambda j: (0, j)),   # W1 chunk (pipelined)
                pl.BlockSpec((1, t_ff), lambda j: (0, j)),   # b1 chunk (pipelined)
                pl.BlockSpec((t_ff, D), lambda j: (j, 0)),   # W2 chunk (pipelined)
                const_spec((1, D)),
                const_spec((1, D)), const_spec((1, D)),
            ],
            out_specs=const_spec((N, D)),
            scratch_shapes=[pltpu.VMEM((N, D), jnp.float32),     # BN1 output (f32, residual)
                            pltpu.VMEM((N, D), compute_dtype),   # BN1 output (bf16, matmul LHS)
                            pltpu.VMEM((N, D), jnp.float32)],    # FF accumulator (f32)
            compiler_params=pltpu.CompilerParams(
                dimension_semantics=("arbitrary",),              # d_ff axis is a reduction
                vmem_limit_bytes=_VMEM_LIMIT_BYTES),
        )(*args)

    return out2d.reshape(bs, L, D)


def tst_encoder_forward(src, layer_params, *, compute_dtype=jnp.bfloat16):
    """TSTEncoder.forward (res_attention=False)."""
    # TODO(synk): layers are separate pallas_calls because the per-layer flip/scramble
    # permutations are applied by XLA gathers between calls; a single resident-activation
    # kernel would need those permutations expressed in-kernel.
    out = src
    for p in layer_params:
        out = tst_encoder_layer_forward(out, p, compute_dtype=compute_dtype)
    return out


# --------------------------- deterministic parameters ---------------------------

def init_encoder_params(key, n_layers, d_model, n_heads, d_ff):
    head_dim = d_model // n_heads
    scale = float(head_dim) ** -0.5                 # lsa=False -> fixed constant
    layers = []
    for layer_idx in range(n_layers):
        lk = jax.random.fold_in(key, layer_idx)
        k1, k2, k3, k4 = jax.random.split(lk, 4)
        bound1 = 1.0 / float(d_model) ** 0.5
        bound2 = 1.0 / float(d_ff) ** 0.5
        layers.append(dict(
            scale=scale,
            bn1_gamma=jnp.ones((1, d_model), jnp.float32),
            bn1_beta=jnp.zeros((1, d_model), jnp.float32),
            # W stored as (in, out) so the kernel does x @ W directly
            w1=jax.random.uniform(k1, (d_model, d_ff), jnp.float32, -1.0, 1.0) * bound1,
            b1=jax.random.uniform(k2, (1, d_ff), jnp.float32, -1.0, 1.0) * bound1,
            w2=jax.random.uniform(k3, (d_ff, d_model), jnp.float32, -1.0, 1.0) * bound2,
            b2=jax.random.uniform(k4, (1, d_model), jnp.float32, -1.0, 1.0) * bound2,
            bn2_gamma=jnp.ones((1, d_model), jnp.float32),
            bn2_beta=jnp.zeros((1, d_model), jnp.float32),
        ))
    return layers


# ------------------------------------ main --------------------------------------

if __name__ == "__main__":
    # d_model a multiple of 128 (lane-dense matmuls & stores); bs even; bs*L/2 % 8 == 0.
    bs, seq_len = 4, 16
    d_model, n_heads, d_ff, n_layers = 128, 8, 512, 2

    key = jax.random.PRNGKey(0)
    k_in, k_par = jax.random.split(key)
    src = jax.random.normal(k_in, (bs, seq_len, d_model), jnp.float32)
    params = init_encoder_params(k_par, n_layers, d_model, n_heads, d_ff)

    fwd = jax.jit(lambda x: tst_encoder_forward(x, params))
    out = jax.block_until_ready(fwd(src))

    assert out.shape == (bs, seq_len, d_model)
    assert bool(jnp.all(jnp.isfinite(out)))
    print("KERNEL_OK")
</pallas_src>

<mosaic_0001>
module attributes {stable_mosaic.version = 11 : i64} {
  func.func @_layer_kernel_fused(%arg0: memref<64x128xf32, #tpu.memory_space<vmem>>, %arg1: memref<64x128xf32, #tpu.memory_space<vmem>>, %arg2: memref<64x128xf32, #tpu.memory_space<vmem>>, %arg3: memref<1x128xf32, #tpu.memory_space<vmem>>, %arg4: memref<1x128xf32, #tpu.memory_space<vmem>>, %arg5: memref<128x512xbf16, #tpu.memory_space<vmem>>, %arg6: memref<1x512xf32, #tpu.memory_space<vmem>>, %arg7: memref<512x128xbf16, #tpu.memory_space<vmem>>, %arg8: memref<1x128xf32, #tpu.memory_space<vmem>>, %arg9: memref<1x128xf32, #tpu.memory_space<vmem>>, %arg10: memref<1x128xf32, #tpu.memory_space<vmem>>, %arg11: memref<64x128xf32, #tpu.memory_space<vmem>>, %arg12: memref<64x128xf32, #tpu.memory_space<vmem>>) attributes {dimension_semantics = [], scalar_prefetch = 0 : i64, scratch_operands = 1 : i64, tpu.core_type = #tpu.core_type<tc>} {
    %c0 = arith.constant 0 : index
    %c0_0 = arith.constant 0 : index
    %0 = vector.load %arg1[%c0, %c0_0] : memref<64x128xf32, #tpu.memory_space<vmem>>, vector<32x128xf32>
    %c32 = arith.constant 32 : index
    %c0_1 = arith.constant 0 : index
    %1 = vector.load %arg1[%c32, %c0_1] : memref<64x128xf32, #tpu.memory_space<vmem>>, vector<32x128xf32>
    %c0_2 = arith.constant 0 : index
    %c0_3 = arith.constant 0 : index
    %2 = vector.load %arg2[%c0_2, %c0_3] : memref<64x128xf32, #tpu.memory_space<vmem>>, vector<32x128xf32>
    %c32_4 = arith.constant 32 : index
    %c0_5 = arith.constant 0 : index
    %3 = vector.load %arg2[%c32_4, %c0_5] : memref<64x128xf32, #tpu.memory_space<vmem>>, vector<32x128xf32>
    %4 = arith.mulf %0, %2 : vector<32x128xf32>
    %5 = arith.mulf %1, %3 : vector<32x128xf32>
    %6 = arith.subf %4, %5 : vector<32x128xf32>
    %cst = arith.constant 2.500000e-01 : f32
    %7 = vector.broadcast %cst : f32 to vector<32x128xf32>
    %8 = arith.mulf %7, %6 : vector<32x128xf32>
    %9 = arith.mulf %0, %3 : vector<32x128xf32>
    %10 = arith.mulf %1, %2 : vector<32x128xf32>
    %11 = arith.subf %9, %10 : vector<32x128xf32>
    %cst_6 = arith.constant 2.500000e-01 : f32
    %12 = vector.broadcast %cst_6 : f32 to vector<32x128xf32>
    %13 = arith.mulf %12, %11 : vector<32x128xf32>
    %c0_7 = arith.constant 0 : index
    %c0_8 = arith.constant 0 : index
    %14 = vector.load %arg0[%c0_7, %c0_8] : memref<64x128xf32, #tpu.memory_space<vmem>>, vector<32x128xf32>
    %15 = arith.subf %8, %13 : vector<32x128xf32>
    %16 = arith.mulf %15, %0 : vector<32x128xf32>
    %17 = arith.addf %14, %16 : vector<32x128xf32>
    %c0_9 = arith.constant 0 : index
    %c0_10 = arith.constant 0 : index
    %18 = vector.load %arg12[%c0_9, %c0_10] : memref<64x128xf32, #tpu.memory_space<vmem>>, vector<32x128xf32>
    tpu.vector_store %arg12[%c0_9, %c0_10], %17 {strides = array<i32>} : memref<64x128xf32, #tpu.memory_space<vmem>>, vector<32x128xf32>,
    %c32_11 = arith.constant 32 : index
    %c0_12 = arith.constant 0 : index
    %19 = vector.load %arg0[%c32_11, %c0_12] : memref<64x128xf32, #tpu.memory_space<vmem>>, vector<32x128xf32>
    %20 = arith.addf %8, %13 : vector<32x128xf32>
    %21 = arith.mulf %20, %0 : vector<32x128xf32>
    %22 = arith.addf %19, %21 : vector<32x128xf32>
    %c32_13 = arith.constant 32 : index
    %c0_14 = arith.constant 0 : index
    %23 = vector.load %arg12[%c32_13, %c0_14] : memref<64x128xf32, #tpu.memory_space<vmem>>, vector<32x128xf32>
    tpu.vector_store %arg12[%c32_13, %c0_14], %22 {strides = array<i32>} : memref<64x128xf32, #tpu.memory_space<vmem>>, vector<32x128xf32>,
    %c0_15 = arith.constant 0 : index
    %c0_16 = arith.constant 0 : index
    %24 = vector.load %arg12[%c0_15, %c0_16] : memref<64x128xf32, #tpu.memory_space<vmem>>, vector<64x128xf32>
    %c0_17 = arith.constant 0 : index
    %c0_18 = arith.constant 0 : index
    %25 = vector.load %arg3[%c0_17, %c0_18] : memref<1x128xf32, #tpu.memory_space<vmem>>, vector<1x128xf32>
    %c0_19 = arith.constant 0 : index
    %c0_20 = arith.constant 0 : index
    %26 = vector.load %arg4[%c0_19, %c0_20] : memref<1x128xf32, #tpu.memory_space<vmem>>, vector<1x128xf32>
    %cst_21 = arith.constant dense<0.000000e+00> : vector<128xf32>
    %27 = vector.multi_reduction <add>, %24, %cst_21 [0] : vector<64x128xf32> to vector<128xf32>
    %28 = vector.shape_cast %27 : vector<128xf32> to vector<1x128xf32>
    %cst_22 = arith.constant 6.400000e+01 : f32
    %29 = vector.broadcast %cst_22 : f32 to vector<1x128xf32>
    %30 = arith.divf %28, %29 : vector<1x128xf32>
    %31 = vector.broadcast %30 : vector<1x128xf32> to vector<64x128xf32>
    %32 = arith.subf %24, %31 : vector<64x128xf32>
    %33 = arith.mulf %32, %32 : vector<64x128xf32>
    %cst_23 = arith.constant dense<0.000000e+00> : vector<128xf32>
    %34 = vector.multi_reduction <add>, %33, %cst_23 [0] : vector<64x128xf32> to vector<128xf32>
    %35 = vector.shape_cast %34 : vector<128xf32> to vector<1x128xf32>
    %cst_24 = arith.constant 6.400000e+01 : f32
    %36 = vector.broadcast %cst_24 : f32 to vector<1x128xf32>
    %37 = arith.divf %35, %36 : vector<1x128xf32>
    %cst_25 = arith.constant 9.99999974E-6 : f32
    %38 = vector.broadcast %cst_25 : f32 to vector<1x128xf32>
    %39 = arith.addf %37, %38 : vector<1x128xf32>
    %40 = math.rsqrt %39 : vector<1x128xf32>
    %41 = vector.broadcast %40 : vector<1x128xf32> to vector<64x128xf32>
    %42 = arith.mulf %32, %41 : vector<64x128xf32>
    %43 = vector.broadcast %25 : vector<1x128xf32> to vector<64x128xf32>
    %44 = arith.mulf %42, %43 : vector<64x128xf32>
    %45 = vector.broadcast %26 : vector<1x128xf32> to vector<64x128xf32>
    %46 = arith.addf %44, %45 : vector<64x128xf32>
    %47 = arith.truncf %46 : vector<64x128xf32> to vector<64x128xbf16>
    %c0_26 = arith.constant 0 : index
    %c0_27 = arith.constant 0 : index
    %48 = vector.load %arg5[%c0_26, %c0_27] : memref<128x512xbf16, #tpu.memory_space<vmem>>, vector<128x512xbf16>
    %cst_28 = arith.constant dense<0.000000e+00> : vector<64x512xf32>
    %49 = tpu.matmul %47, %48, %cst_28 {dimension_numbers = #tpu.dot_dimension_numbers<[1], [0], [0], [1], [0, 0, 1, 1], [], []>} : vector<64x128xbf16>, vector<128x512xbf16>, vector<64x512xf32> -> vector<64x512xf32>
    %c0_29 = arith.constant 0 : index
    %c0_30 = arith.constant 0 : index
    %50 = vector.load %arg6[%c0_29, %c0_30] : memref<1x512xf32, #tpu.memory_space<vmem>>, vector<1x512xf32>
    %51 = vector.broadcast %50 : vector<1x512xf32> to vector<64x512xf32>
    %52 = arith.addf %49, %51 : vector<64x512xf32>
    %cst_31 = arith.constant 5.000000e-01 : f32
    %53 = vector.broadcast %cst_31 : f32 to vector<64x512xf32>
    %54 = arith.mulf %53, %52 : vector<64x512xf32>
    %55 = arith.mulf %52, %52 : vector<64x512xf32>
    %56 = arith.mulf %55, %52 : vector<64x512xf32>
    %cst_32 = arith.constant 4.471500e-02 : f32
    %57 = vector.broadcast %cst_32 : f32 to vector<64x512xf32>
    %58 = arith.mulf %57, %56 : vector<64x512xf32>
    %59 = arith.addf %52, %58 : vector<64x512xf32>
    %cst_33 = arith.constant 0.797884583 : f32
    %60 = vector.broadcast %cst_33 : f32 to vector<64x512xf32>
    %61 = arith.mulf %60, %59 : vector<64x512xf32>
    %62 = math.tanh %61 : vector<64x512xf32>
    %cst_34 = arith.constant 1.000000e+00 : f32
    %63 = vector.broadcast %cst_34 : f32 to vector<64x512xf32>
    %64 = arith.addf %63, %62 : vector<64x512xf32>
    %65 = arith.mulf %54, %64 : vector<64x512xf32>
    %66 = arith.truncf %65 : vector<64x512xf32> to vector<64x512xbf16>
    %c0_35 = arith.constant 0 : index
    %c0_36 = arith.constant 0 : index
    %67 = vector.load %arg7[%c0_35, %c0_36] : memref<512x128xbf16, #tpu.memory_space<vmem>>, vector<512x128xbf16>
    %cst_37 = arith.constant dense<0.000000e+00> : vector<64x128xf32>
    %68 = tpu.matmul %66, %67, %cst_37 {dimension_numbers = #tpu.dot_dimension_numbers<[1], [0], [0], [1], [0, 0, 1, 1], [], []>} : vector<64x512xbf16>, vector<512x128xbf16>, vector<64x128xf32> -> vector<64x128xf32>
    %c0_38 = arith.constant 0 : index
    %c0_39 = arith.constant 0 : index
    %69 = vector.load %arg8[%c0_38, %c0_39] : memref<1x128xf32, #tpu.memory_space<vmem>>, vector<1x128xf32>
    %70 = vector.broadcast %69 : vector<1x128xf32> to vector<64x128xf32>
    %71 = arith.addf %68, %70 : vector<64x128xf32>
    %72 = arith.addf %46, %71 : vector<64x128xf32>
    %c0_40 = arith.constant 0 : index
    %c0_41 = arith.constant 0 : index
    %73 = vector.load %arg9[%c0_40, %c0_41] : memref<1x128xf32, #tpu.memory_space<vmem>>, vector<1x128xf32>
    %c0_42 = arith.constant 0 : index
    %c0_43 = arith.constant 0 : index
    %74 = vector.load %arg10[%c0_42, %c0_43] : memref<1x128xf32, #tpu.memory_space<vmem>>, vector<1x128xf32>
    %cst_44 = arith.constant dense<0.000000e+00> : vector<128xf32>
    %75 = vector.multi_reduction <add>, %72, %cst_44 [0] : vector<64x128xf32> to vector<128xf32>
    %76 = vector.shape_cast %75 : vector<128xf32> to vector<1x128xf32>
    %cst_45 = arith.constant 6.400000e+01 : f32
    %77 = vector.broadcast %cst_45 : f32 to vector<1x128xf32>
    %78 = arith.divf %76, %77 : vector<1x128xf32>
    %79 = vector.broadcast %78 : vector<1x128xf32> to vector<64x128xf32>
    %80 = arith.subf %72, %79 : vector<64x128xf32>
    %81 = arith.mulf %80, %80 : vector<64x128xf32>
    %cst_46 = arith.constant dense<0.000000e+00> : vector<128xf32>
    %82 = vector.multi_reduction <add>, %81, %cst_46 [0] : vector<64x128xf32> to vector<128xf32>
    %83 = vector.shape_cast %82 : vector<128xf32> to vector<1x128xf32>
    %cst_47 = arith.constant 6.400000e+01 : f32
    %84 = vector.broadcast %cst_47 : f32 to vector<1x128xf32>
    %85 = arith.divf %83, %84 : vector<1x128xf32>
    %cst_48 = arith.constant 9.99999974E-6 : f32
    %86 = vector.broadcast %cst_48 : f32 to vector<1x128xf32>
    %87 = arith.addf %85, %86 : vector<1x128xf32>
    %88 = math.rsqrt %87 : vector<1x128xf32>
    %89 = vector.broadcast %88 : vector<1x128xf32> to vector<64x128xf32>
    %90 = arith.mulf %80, %89 : vector<64x128xf32>
    %91 = vector.broadcast %73 : vector<1x128xf32> to vector<64x128xf32>
    %92 = arith.mulf %90, %91 : vector<64x128xf32>
    %93 = vector.broadcast %74 : vector<1x128xf32> to vector<64x128xf32>
    %94 = arith.addf %92, %93 : vector<64x128xf32>
    %c0_49 = arith.constant 0 : index
    %c0_50 = arith.constant 0 : index
    %95 = vector.load %arg11[%c0_49, %c0_50] : memref<64x128xf32, #tpu.memory_space<vmem>>, vector<64x128xf32>
    tpu.vector_store %arg11[%c0_49, %c0_50], %94 {strides = array<i32>} : memref<64x128xf32, #tpu.memory_space<vmem>>, vector<64x128xf32>,
    return
  }
}

module attributes {stable_mosaic.version = 11 : i64} {
  func.func @_layer_kernel_fused(%arg0: memref<64x128xf32, #tpu.memory_space<vmem>>, %arg1: memref<64x128xf32, #tpu.memory_space<vmem>>, %arg2: memref<64x128xf32, #tpu.memory_space<vmem>>, %arg3: memref<1x128xf32, #tpu.memory_space<vmem>>, %arg4: memref<1x128xf32, #tpu.memory_space<vmem>>, %arg5: memref<128x512xbf16, #tpu.memory_space<vmem>>, %arg6: memref<1x512xf32, #tpu.memory_space<vmem>>, %arg7: memref<512x128xbf16, #tpu.memory_space<vmem>>, %arg8: memref<1x128xf32, #tpu.memory_space<vmem>>, %arg9: memref<1x128xf32, #tpu.memory_space<vmem>>, %arg10: memref<1x128xf32, #tpu.memory_space<vmem>>, %arg11: memref<64x128xf32, #tpu.memory_space<vmem>>, %arg12: memref<64x128xf32, #tpu.memory_space<vmem>>) attributes {dimension_semantics = [], scalar_prefetch = 0 : i64, scratch_operands = 1 : i64, tpu.core_type = #tpu.core_type<tc>} {
    %c0 = arith.constant 0 : index
    %c0_0 = arith.constant 0 : index
    %0 = vector.load %arg1[%c0, %c0_0] : memref<64x128xf32, #tpu.memory_space<vmem>>, vector<32x128xf32>
    %c32 = arith.constant 32 : index
    %c0_1 = arith.constant 0 : index
    %1 = vector.load %arg1[%c32, %c0_1] : memref<64x128xf32, #tpu.memory_space<vmem>>, vector<32x128xf32>
    %c0_2 = arith.constant 0 : index
    %c0_3 = arith.constant 0 : index
    %2 = vector.load %arg2[%c0_2, %c0_3] : memref<64x128xf32, #tpu.memory_space<vmem>>, vector<32x128xf32>
    %c32_4 = arith.constant 32 : index
    %c0_5 = arith.constant 0 : index
    %3 = vector.load %arg2[%c32_4, %c0_5] : memref<64x128xf32, #tpu.memory_space<vmem>>, vector<32x128xf32>
    %4 = arith.mulf %0, %2 : vector<32x128xf32>
    %5 = arith.mulf %1, %3 : vector<32x128xf32>
    %6 = arith.subf %4, %5 : vector<32x128xf32>
    %cst = arith.constant 2.500000e-01 : f32
    %7 = vector.broadcast %cst : f32 to vector<32x128xf32>
    %8 = arith.mulf %7, %6 : vector<32x128xf32>
    %9 = arith.mulf %0, %3 : vector<32x128xf32>
    %10 = arith.mulf %1, %2 : vector<32x128xf32>
    %11 = arith.subf %9, %10 : vector<32x128xf32>
    %cst_6 = arith.constant 2.500000e-01 : f32
    %12 = vector.broadcast %cst_6 : f32 to vector<32x128xf32>
    %13 = arith.mulf %12, %11 : vector<32x128xf32>
    %c0_7 = arith.constant 0 : index
    %c0_8 = arith.constant 0 : index
    %14 = vector.load %arg0[%c0_7, %c0_8] : memref<64x128xf32, #tpu.memory_space<vmem>>, vector<32x128xf32>
    %15 = arith.subf %8, %13 : vector<32x128xf32>
    %16 = arith.mulf %15, %0 : vector<32x128xf32>
    %17 = arith.addf %14, %16 : vector<32x128xf32>
    %c0_9 = arith.constant 0 : index
    %c0_10 = arith.constant 0 : index
    %18 = vector.load %arg12[%c0_9, %c0_10] : memref<64x128xf32, #tpu.memory_space<vmem>>, vector<32x128xf32>
    tpu.vector_store %arg12[%c0_9, %c0_10], %17 {strides = array<i32>} : memref<64x128xf32, #tpu.memory_space<vmem>>, vector<32x128xf32>,
    %c32_11 = arith.constant 32 : index
    %c0_12 = arith.constant 0 : index
    %19 = vector.load %arg0[%c32_11, %c0_12] : memref<64x128xf32, #tpu.memory_space<vmem>>, vector<32x128xf32>
    %20 = arith.addf %8, %13 : vector<32x128xf32>
    %21 = arith.mulf %20, %0 : vector<32x128xf32>
    %22 = arith.addf %19, %21 : vector<32x128xf32>
    %c32_13 = arith.constant 32 : index
    %c0_14 = arith.constant 0 : index
    %23 = vector.load %arg12[%c32_13, %c0_14] : memref<64x128xf32, #tpu.memory_space<vmem>>, vector<32x128xf32>
    tpu.vector_store %arg12[%c32_13, %c0_14], %22 {strides = array<i32>} : memref<64x128xf32, #tpu.memory_space<vmem>>, vector<32x128xf32>,
    %c0_15 = arith.constant 0 : index
    %c0_16 = arith.constant 0 : index
    %24 = vector.load %arg12[%c0_15, %c0_16] : memref<64x128xf32, #tpu.memory_space<vmem>>, vector<64x128xf32>
    %c0_17 = arith.constant 0 : index
    %c0_18 = arith.constant 0 : index
    %25 = vector.load %arg3[%c0_17, %c0_18] : memref<1x128xf32, #tpu.memory_space<vmem>>, vector<1x128xf32>
    %c0_19 = arith.constant 0 : index
    %c0_20 = arith.constant 0 : index
    %26 = vector.load %arg4[%c0_19, %c0_20] : memref<1x128xf32, #tpu.memory_space<vmem>>, vector<1x128xf32>
    %cst_21 = arith.constant dense<0.000000e+00> : vector<128xf32>
    %27 = vector.multi_reduction <add>, %24, %cst_21 [0] : vector<64x128xf32> to vector<128xf32>
    %28 = vector.shape_cast %27 : vector<128xf32> to vector<1x128xf32>
    %cst_22 = arith.constant 6.400000e+01 : f32
    %29 = vector.broadcast %cst_22 : f32 to vector<1x128xf32>
    %30 = arith.divf %28, %29 : vector<1x128xf32>
    %31 = vector.broadcast %30 : vector<1x128xf32> to vector<64x128xf32>
    %32 = arith.subf %24, %31 : vector<64x128xf32>
    %33 = arith.mulf %32, %32 : vector<64x128xf32>
    %cst_23 = arith.constant dense<0.000000e+00> : vector<128xf32>
    %34 = vector.multi_reduction <add>, %33, %cst_23 [0] : vector<64x128xf32> to vector<128xf32>
    %35 = vector.shape_cast %34 : vector<128xf32> to vector<1x128xf32>
    %cst_24 = arith.constant 6.400000e+01 : f32
    %36 = vector.broadcast %cst_24 : f32 to vector<1x128xf32>
    %37 = arith.divf %35, %36 : vector<1x128xf32>
    %cst_25 = arith.constant 9.99999974E-6 : f32
    %38 = vector.broadcast %cst_25 : f32 to vector<1x128xf32>
    %39 = arith.addf %37, %38 : vector<1x128xf32>
    %40 = math.rsqrt %39 : vector<1x128xf32>
    %41 = vector.broadcast %40 : vector<1x128xf32> to vector<64x128xf32>
    %42 = arith.mulf %32, %41 : vector<64x128xf32>
    %43 = vector.broadcast %25 : vector<1x128xf32> to vector<64x128xf32>
    %44 = arith.mulf %42, %43 : vector<64x128xf32>
    %45 = vector.broadcast %26 : vector<1x128xf32> to vector<64x128xf32>
    %46 = arith.addf %44, %45 : vector<64x128xf32>
    %47 = arith.truncf %46 : vector<64x128xf32> to vector<64x128xbf16>
    %c0_26 = arith.constant 0 : index
    %c0_27 = arith.constant 0 : index
    %48 = vector.load %arg5[%c0_26, %c0_27] : memref<128x512xbf16, #tpu.memory_space<vmem>>, vector<128x512xbf16>
    %cst_28 = arith.constant dense<0.000000e+00> : vector<64x512xf32>
    %49 = tpu.matmul %47, %48, %cst_28 {dimension_numbers = #tpu.dot_dimension_numbers<[1], [0], [0], [1], [0, 0, 1, 1], [], []>} : vector<64x128xbf16>, vector<128x512xbf16>, vector<64x512xf32> -> vector<64x512xf32>
    %c0_29 = arith.constant 0 : index
    %c0_30 = arith.constant 0 : index
    %50 = vector.load %arg6[%c0_29, %c0_30] : memref<1x512xf32, #tpu.memory_space<vmem>>, vector<1x512xf32>
    %51 = vector.broadcast %50 : vector<1x512xf32> to vector<64x512xf32>
    %52 = arith.addf %49, %51 : vector<64x512xf32>
    %cst_31 = arith.constant 5.000000e-01 : f32
    %53 = vector.broadcast %cst_31 : f32 to vector<64x512xf32>
    %54 = arith.mulf %53, %52 : vector<64x512xf32>
    %55 = arith.mulf %52, %52 : vector<64x512xf32>
    %56 = arith.mulf %55, %52 : vector<64x512xf32>
    %cst_32 = arith.constant 4.471500e-02 : f32
    %57 = vector.broadcast %cst_32 : f32 to vector<64x512xf32>
    %58 = arith.mulf %57, %56 : vector<64x512xf32>
    %59 = arith.addf %52, %58 : vector<64x512xf32>
    %cst_33 = arith.constant 0.797884583 : f32
    %60 = vector.broadcast %cst_33 : f32 to vector<64x512xf32>
    %61 = arith.mulf %60, %59 : vector<64x512xf32>
    %62 = math.tanh %61 : vector<64x512xf32>
    %cst_34 = arith.constant 1.000000e+00 : f32
    %63 = vector.broadcast %cst_34 : f32 to vector<64x512xf32>
    %64 = arith.addf %63, %62 : vector<64x512xf32>
    %65 = arith.mulf %54, %64 : vector<64x512xf32>
    %66 = arith.truncf %65 : vector<64x512xf32> to vector<64x512xbf16>
    %c0_35 = arith.constant 0 : index
    %c0_36 = arith.constant 0 : index
    %67 = vector.load %arg7[%c0_35, %c0_36] : memref<512x128xbf16, #tpu.memory_space<vmem>>, vector<512x128xbf16>
    %cst_37 = arith.constant dense<0.000000e+00> : vector<64x128xf32>
    %68 = tpu.matmul %66, %67, %cst_37 {dimension_numbers = #tpu.dot_dimension_numbers<[1], [0], [0], [1], [0, 0, 1, 1], [], []>} : vector<64x512xbf16>, vector<512x128xbf16>, vector<64x128xf32> -> vector<64x128xf32>
    %c0_38 = arith.constant 0 : index
    %c0_39 = arith.constant 0 : index
    %69 = vector.load %arg8[%c0_38, %c0_39] : memref<1x128xf32, #tpu.memory_space<vmem>>, vector<1x128xf32>
    %70 = vector.broadcast %69 : vector<1x128xf32> to vector<64x128xf32>
    %71 = arith.addf %68, %70 : vector<64x128xf32>
    %72 = arith.addf %46, %71 : vector<64x128xf32>
    %c0_40 = arith.constant 0 : index
    %c0_41 = arith.constant 0 : index
    %73 = vector.load %arg9[%c0_40, %c0_41] : memref<1x128xf32, #tpu.memory_space<vmem>>, vector<1x128xf32>
    %c0_42 = arith.constant 0 : index
    %c0_43 = arith.constant 0 : index
    %74 = vector.load %arg10[%c0_42, %c0_43] : memref<1x128xf32, #tpu.memory_space<vmem>>, vector<1x128xf32>
    %cst_44 = arith.constant dense<0.000000e+00> : vector<128xf32>
    %75 = vector.multi_reduction <add>, %72, %cst_44 [0] : vector<64x128xf32> to vector<128xf32>
    %76 = vector.shape_cast %75 : vector<128xf32> to vector<1x128xf32>
    %cst_45 = arith.constant 6.400000e+01 : f32
    %77 = vector.broadcast %cst_45 : f32 to vector<1x128xf32>
    %78 = arith.divf %76, %77 : vector<1x128xf32>
    %79 = vector.broadcast %78 : vector<1x128xf32> to vector<64x128xf32>
    %80 = arith.subf %72, %79 : vector<64x128xf32>
    %81 = arith.mulf %80, %80 : vector<64x128xf32>
    %cst_46 = arith.constant dense<0.000000e+00> : vector<128xf32>
    %82 = vector.multi_reduction <add>, %81, %cst_46 [0] : vector<64x128xf32> to vector<128xf32>
    %83 = vector.shape_cast %82 : vector<128xf32> to vector<1x128xf32>
    %cst_47 = arith.constant 6.400000e+01 : f32
    %84 = vector.broadcast %cst_47 : f32 to vector<1x128xf32>
    %85 = arith.divf %83, %84 : vector<1x128xf32>
    %cst_48 = arith.constant 9.99999974E-6 : f32
    %86 = vector.broadcast %cst_48 : f32 to vector<1x128xf32>
    %87 = arith.addf %85, %86 : vector<1x128xf32>
    %88 = math.rsqrt %87 : vector<1x128xf32>
    %89 = vector.broadcast %88 : vector<1x128xf32> to vector<64x128xf32>
    %90 = arith.mulf %80, %89 : vector<64x128xf32>
    %91 = vector.broadcast %73 : vector<1x128xf32> to vector<64x128xf32>
    %92 = arith.mulf %90, %91 : vector<64x128xf32>
    %93 = vector.broadcast %74 : vector<1x128xf32> to vector<64x128xf32>
    %94 = arith.addf %92, %93 : vector<64x128xf32>
    %c0_49 = arith.constant 0 : index
    %c0_50 = arith.constant 0 : index
    %95 = vector.load %arg11[%c0_49, %c0_50] : memref<64x128xf32, #tpu.memory_space<vmem>>, vector<64x128xf32>
    tpu.vector_store %arg11[%c0_49, %c0_50], %94 {strides = array<i32>} : memref<64x128xf32, #tpu.memory_space<vmem>>, vector<64x128xf32>,
    return
  }
}

</mosaic_0001>

<llo_original>
// kernel: _lambda_.2
$region0: #{_lambda_.2}
  #allocation0 [shape = 'u32[]', space=smem, size = 0x4, offset = 0x4, fixed_abs, tag = 'smem constant byte address 0x4 - core index']
  #allocation1 [shape = 'u32[72,128]{1,0:T(1,128)}', space=vmem, size = 0x9000, scoped, tag = 'internal scratch']
  #allocation2 [shape = 'f32[64,128]{1,0:T(8,128)}', space=vmem, size = 0x8000, scoped, tag = 'scratch operand']
  %s0 = inlined_call_operand.vmem [shape: f32[64,128], index: 0, kind: input, shape index: {}]
  %s1 = inlined_call_operand.vmem [shape: f32[64,128], index: 1, kind: input, shape index: {}]
  %s2 = inlined_call_operand.vmem [shape: f32[64,128], index: 2, kind: input, shape index: {}]
  %s3 = inlined_call_operand.vmem [shape: f32[1,128], index: 3, kind: input, shape index: {}, may-alias: {3,9}]
  %s4 = inlined_call_operand.vmem [shape: f32[1,128], index: 4, kind: input, shape index: {}, may-alias: {4,10}]
  %s5 = inlined_call_operand.vmem [shape: bf16[128,512], index: 5, kind: input, shape index: {}]
  %s6 = inlined_call_operand.vmem [shape: f32[1,512], index: 6, kind: input, shape index: {}]
  %s7 = inlined_call_operand.vmem [shape: bf16[512,128], index: 7, kind: input, shape index: {}]
  %s8 = inlined_call_operand.vmem [shape: f32[1,128], index: 8, kind: input, shape index: {}]
  %s9 = inlined_call_operand.vmem [shape: f32[1,128], index: 9, kind: input, shape index: {}, may-alias: {3,9}]
  %s10 = inlined_call_operand.vmem [shape: f32[1,128], index: 10, kind: input, shape index: {}, may-alias: {4,10}]
  %s11 = inlined_call_operand.vmem [shape: f32[64,128], index: 11, kind: output, shape index: {}]
  %s12 = sld [smem:[#allocation0]]
  $region54: #{_lambda_.2} parent=0
    _
  %s14 = ssub.s32 1, %s12
  %s15 = scalar_select 0, %s14, %s12
  // Predicated region
  $region2: #{_lambda_.2} parent=0 // pred_check
    _
  $region3: #{_lambda_.2} parent=0 // pred_check_branch
    %17 = sbr.rel (0) target = $region5
  $region4: #{_lambda_.2} parent=0 // pred_region
    _
  $region5: #{_lambda_.2} parent=0 // pred_fallthru
    _
  // Predicated region
  $region6: #{_lambda_.2} parent=0 // pred_check
    _
  $region7: #{_lambda_.2} parent=0 // pred_check_branch
    %19 = sbr.rel (0) target = $region9
  $region8: #{_lambda_.2} parent=0 // pred_region
    _
  $region9: #{_lambda_.2} parent=0 // pred_fallthru
    _
  // Predicated region
  $region10: #{_lambda_.2} parent=0 // pred_check
    _
  $region11: #{_lambda_.2} parent=0 // pred_check_branch
    %21 = sbr.rel (0) target = $region13
  $region12: #{_lambda_.2} parent=0 // pred_region
    _
  $region13: #{_lambda_.2} parent=0 // pred_fallthru
    _
  // Predicated region
  $region14: #{_lambda_.2} parent=0 // pred_check
    _
  $region15: #{_lambda_.2} parent=0 // pred_check_branch
    %23 = sbr.rel (0) target = $region17
  $region16: #{_lambda_.2} parent=0 // pred_region
    _
  $region17: #{_lambda_.2} parent=0 // pred_fallthru
    _
  // Predicated region
  $region18: #{_lambda_.2} parent=0 // pred_check
    _
  $region19: #{_lambda_.2} parent=0 // pred_check_branch
    %25 = sbr.rel (0) target = $region21
  $region20: #{_lambda_.2} parent=0 // pred_region
    _
  $region21: #{_lambda_.2} parent=0 // pred_fallthru
    _
  // Predicated region
  $region22: #{_lambda_.2} parent=0 // pred_check
    _
  $region23: #{_lambda_.2} parent=0 // pred_check_branch
    %27 = sbr.rel (0) target = $region25
  $region24: #{_lambda_.2} parent=0 // pred_region
    _
  $region25: #{_lambda_.2} parent=0 // pred_fallthru
    _
  // Predicated region
  $region26: #{_lambda_.2} parent=0 // pred_check
    _
  $region27: #{_lambda_.2} parent=0 // pred_check_branch
    %29 = sbr.rel (0) target = $region29
  $region28: #{_lambda_.2} parent=0 // pred_region
    _
  $region29: #{_lambda_.2} parent=0 // pred_fallthru
    _
  // Predicated region
  $region30: #{_lambda_.2} parent=0 // pred_check
    _
  $region31: #{_lambda_.2} parent=0 // pred_check_branch
    %31 = sbr.rel (0) target = $region33
  $region32: #{_lambda_.2} parent=0 // pred_region
    _
  $region33: #{_lambda_.2} parent=0 // pred_fallthru
    _
  // Predicated region
  $region34: #{_lambda_.2} parent=0 // pred_check
    _
  $region35: #{_lambda_.2} parent=0 // pred_check_branch
    %33 = sbr.rel (0) target = $region37
  $region36: #{_lambda_.2} parent=0 // pred_region
    _
  $region37: #{_lambda_.2} parent=0 // pred_fallthru
    _
  // Predicated region
  $region38: #{_lambda_.2} parent=0 // pred_check
    _
  $region39: #{_lambda_.2} parent=0 // pred_check_branch
    %35 = sbr.rel (0) target = $region41
  $region40: #{_lambda_.2} parent=0 // pred_region
    _
  $region41: #{_lambda_.2} parent=0 // pred_fallthru
    _
  // Predicated region
  $region42: #{_lambda_.2} parent=0 // pred_check
    _
  $region43: #{_lambda_.2} parent=0 // pred_check_branch
    %37 = sbr.rel (0) target = $region45
  $region44: #{_lambda_.2} parent=0 // pred_region
    _
  $region45: #{_lambda_.2} parent=0 // pred_fallthru
    _
  %v38 = vld [vmem:[%s1] sm:$0xff]
  %v39 = vld [vmem:[%s1 + $0x8] sm:$0xff]
  %v40 = vld [vmem:[%s1 + $0x10] sm:$0xff]
  %v41 = vld [vmem:[%s1 + $0x18] sm:$0xff]
  %v42 = vld [vmem:[%s1 + $0x20] sm:$0xff]
  %v43 = vld [vmem:[%s1 + $0x28] sm:$0xff]
  %v44 = vld [vmem:[%s1 + $0x30] sm:$0xff]
  %v45 = vld [vmem:[%s1 + $0x38] sm:$0xff]
  %v46 = vld [vmem:[%s2] sm:$0xff]
  %v47 = vld [vmem:[%s2 + $0x8] sm:$0xff]
  %v48 = vld [vmem:[%s2 + $0x10] sm:$0xff]
  %v49 = vld [vmem:[%s2 + $0x18] sm:$0xff]
  %v50 = vld [vmem:[%s2 + $0x20] sm:$0xff]
  %v51 = vld [vmem:[%s2 + $0x28] sm:$0xff]
  %v52 = vld [vmem:[%s2 + $0x30] sm:$0xff]
  %v53 = vld [vmem:[%s2 + $0x38] sm:$0xff]
  %v54 = vmul.f32 %v38, %v46
  %v55 = vmul.f32 %v39, %v47
  %v56 = vmul.f32 %v40, %v48
  %v57 = vmul.f32 %v41, %v49
  %v58 = vmul.f32 %v42, %v50
  %v59 = vmul.f32 %v43, %v51
  %v60 = vmul.f32 %v44, %v52
  %v61 = vmul.f32 %v45, %v53
  %v62 = vsub.f32 %v54, %v58
  %v63 = vsub.f32 %v55, %v59
  %v64 = vsub.f32 %v56, %v60
  %v65 = vsub.f32 %v57, %v61
  %v66 = vmul.f32 %v62, 0.25
  %v67 = vmul.f32 %v63, 0.25
  %v68 = vmul.f32 %v64, 0.25
  %v69 = vmul.f32 %v65, 0.25
  %v70 = vmul.f32 %v38, %v50
  %v71 = vmul.f32 %v39, %v51
  %v72 = vmul.f32 %v40, %v52
  %v73 = vmul.f32 %v41, %v53
  %v74 = vmul.f32 %v42, %v46
  %v75 = vmul.f32 %v43, %v47
  %v76 = vmul.f32 %v44, %v48
  %v77 = vmul.f32 %v45, %v49
  %v78 = vsub.f32 %v70, %v74
  %v79 = vsub.f32 %v71, %v75
  %v80 = vsub.f32 %v72, %v76
  %v81 = vsub.f32 %v73, %v77
  %v82 = vmul.f32 %v78, 0.25
  %v83 = vmul.f32 %v79, 0.25
  %v84 = vmul.f32 %v80, 0.25
  %v85 = vmul.f32 %v81, 0.25
  %v86 = vld [vmem:[%s0] sm:$0xff]
  %v87 = vld [vmem:[%s0 + $0x8] sm:$0xff]
  %v88 = vld [vmem:[%s0 + $0x10] sm:$0xff]
  %v89 = vld [vmem:[%s0 + $0x18] sm:$0xff]
  %v90 = vsub.f32 %v66, %v82
  %v91 = vsub.f32 %v67, %v83
  %v92 = vsub.f32 %v68, %v84
  %v93 = vsub.f32 %v69, %v85
  %v94 = vmul.f32 %v90, %v38
  %v95 = vmul.f32 %v91, %v39
  %v96 = vmul.f32 %v92, %v40
  %v97 = vmul.f32 %v93, %v41
  %v98 = vadd.f32 %v86, %v94
  %v99 = vadd.f32 %v87, %v95
  %v100 = vadd.f32 %v88, %v96
  %v101 = vadd.f32 %v89, %v97
  %102 = vst [vmem:[#allocation2] sm:$0xff] %v98
  %103 = vst [vmem:[#allocation2 + $0x8] sm:$0xff] %v99
  %104 = vst [vmem:[#allocation2 + $0x10] sm:$0xff] %v100
  %105 = vst [vmem:[#allocation2 + $0x18] sm:$0xff] %v101
  %v106 = vld [vmem:[%s0 + $0x20] sm:$0xff]
  %v107 = vld [vmem:[%s0 + $0x28] sm:$0xff]
  %v108 = vld [vmem:[%s0 + $0x30] sm:$0xff]
  %v109 = vld [vmem:[%s0 + $0x38] sm:$0xff]
  %v110 = vadd.f32 %v66, %v82
  %v111 = vadd.f32 %v67, %v83
  %v112 = vadd.f32 %v68, %v84
  %v113 = vadd.f32 %v69, %v85
  %v114 = vmul.f32 %v110, %v38
  %v115 = vmul.f32 %v111, %v39
  %v116 = vmul.f32 %v112, %v40
  %v117 = vmul.f32 %v113, %v41
  %v118 = vadd.f32 %v106, %v114
  %v119 = vadd.f32 %v107, %v115
  %v120 = vadd.f32 %v108, %v116
  %v121 = vadd.f32 %v109, %v117
  %122 = vst [vmem:[#allocation2 + $0x20] sm:$0xff] %v118
  %123 = vst [vmem:[#allocation2 + $0x28] sm:$0xff] %v119
  %124 = vst [vmem:[#allocation2 + $0x30] sm:$0xff] %v120
  %125 = vst [vmem:[#allocation2 + $0x38] sm:$0xff] %v121
  %v126 = vld [vmem:[#allocation2] sm:$0xff]
  %v127 = vld [vmem:[#allocation2 + $0x8] sm:$0xff]
  %v128 = vld [vmem:[#allocation2 + $0x10] sm:$0xff]
  %v129 = vld [vmem:[#allocation2 + $0x18] sm:$0xff]
  %v130 = vld [vmem:[#allocation2 + $0x20] sm:$0xff]
  %v131 = vld [vmem:[#allocation2 + $0x28] sm:$0xff]
  %v132 = vld [vmem:[#allocation2 + $0x30] sm:$0xff]
  %v133 = vld [vmem:[#allocation2 + $0x38] sm:$0xff]
  %v134 = vld [vmem:[%s3] sm:$0x1]
  %v135 = vld [vmem:[%s4] sm:$0x1]
  %v136 = vadd.f32 %v126, %v127
  %v137 = vadd.f32 %v136, %v128
  %v138 = vadd.f32 %v137, %v129
  %v139 = vadd.f32 %v138, %v130
  %v140 = vadd.f32 %v139, %v131
  %v141 = vadd.f32 %v140, %v132
  %v142 = vadd.f32 %v141, %v133
  %v143 = vrot.slane %v142, 4
  %v144 = vadd.f32 %v142, %v143
  %v145 = vrot.slane %v144, 2
  %v146 = vadd.f32 %v144, %v145
  %v147 = vrot.slane %v146, 1
  %v148 = vadd.f32 %v146, %v147
  %v149 = vrcp.pop 64.0
  %v150 = vmul.f32 64.0, %v149
  %v151 = vsub.f32 1.0, %v150
  %v152 = vmul.f32 %v149, %v151
  %v153 = vadd.f32 %v149, %v152
  %vm154 = vweird.f32 %v149
  %v155 = vsel %vm154, %v149, %v153
  %v156 = vmul.f32 %v148, %v155
  %v157 = vsub.f32 %v126, %v156
  %v158 = vsub.f32 %v127, %v156
  %v159 = vsub.f32 %v128, %v156
  %v160 = vsub.f32 %v129, %v156
  %v161 = vsub.f32 %v130, %v156
  %v162 = vsub.f32 %v131, %v156
  %v163 = vsub.f32 %v132, %v156
  %v164 = vsub.f32 %v133, %v156
  %v165 = vmul.f32 %v157, %v157
  %v166 = vmul.f32 %v158, %v158
  %v167 = vmul.f32 %v159, %v159
  %v168 = vmul.f32 %v160, %v160
  %v169 = vmul.f32 %v161, %v161
  %v170 = vmul.f32 %v162, %v162
  %v171 = vmul.f32 %v163, %v163
  %v172 = vmul.f32 %v164, %v164
  %v173 = vadd.f32 %v165, %v166
  %v174 = vadd.f32 %v173, %v167
  %v175 = vadd.f32 %v174, %v168
  %v176 = vadd.f32 %v175, %v169
  %v177 = vadd.f32 %v176, %v170
  %v178 = vadd.f32 %v177, %v171
  %v179 = vadd.f32 %v178, %v172
  %v180 = vrot.slane %v179, 4
  %v181 = vadd.f32 %v179, %v180
  %v182 = vrot.slane %v181, 2
  %v183 = vadd.f32 %v181, %v182
  %v184 = vrot.slane %v183, 1
  %v185 = vadd.f32 %v183, %v184
  %v186 = vmul.f32 %v185, %v155
  %v187 = vadd.f32 %v186, 1e-05
  %v188 = vrsqrt.pop %v187
  %v189 = vmul.f32 %v188, %v187
  %v190 = vmul.f32 %v189, %v188
  %v191 = vmul.f32 0.5, %v190
  %v192 = vsub.f32 1.5, %v191
  %v193 = vmul.f32 %v188, %v192
  %vm194 = vweird.f32 %v187
  %vm195 = vweird.f32 %v188
  %vm196 = vmor %vm194, %vm195
  %v197 = vsel %vm196, %v188, %v193
  %v198 = vmul.f32 %v157, %v197
  %v199 = vmul.f32 %v158, %v197
  %v200 = vmul.f32 %v159, %v197
  %v201 = vmul.f32 %v160, %v197
  %v202 = vmul.f32 %v161, %v197
  %v203 = vmul.f32 %v162, %v197
  %v204 = vmul.f32 %v163, %v197
  %v205 = vmul.f32 %v164, %v197
  %v207 = vperm.slane %v134, 0
  %v209 = vmul.f32 %v198, %v207
  %v210 = vmul.f32 %v199, %v207
  %v211 = vmul.f32 %v200, %v207
  %v212 = vmul.f32 %v201, %v207
  %v213 = vmul.f32 %v202, %v207
  %v214 = vmul.f32 %v203, %v207
  %v215 = vmul.f32 %v204, %v207
  %v216 = vmul.f32 %v205, %v207
  %v218 = vperm.slane %v135, 0
  %v220 = vadd.f32 %v209, %v218
  %v221 = vadd.f32 %v210, %v218
  %v222 = vadd.f32 %v211, %v218
  %v223 = vadd.f32 %v212, %v218
  %v224 = vadd.f32 %v213, %v218
  %v225 = vadd.f32 %v214, %v218
  %v226 = vadd.f32 %v215, %v218
  %v227 = vadd.f32 %v216, %v218
  %v228 = vpack.c.bf16 %v221, %v220
  %v229 = vpack.c.bf16 %v223, %v222
  %v230 = vpack.c.bf16 %v225, %v224
  %v231 = vpack.c.bf16 %v227, %v226
  %v232 = vld [vmem:[%s5] sm:$0xff]
  %v233 = vld [vmem:[%s5 + $0x8] sm:$0xff]
  %v234 = vld [vmem:[%s5 + $0x10] sm:$0xff]
  %v235 = vld [vmem:[%s5 + $0x18] sm:$0xff]
  %v236 = vld [vmem:[%s5 + $0x20] sm:$0xff]
  %v237 = vld [vmem:[%s5 + $0x28] sm:$0xff]
  %v238 = vld [vmem:[%s5 + $0x30] sm:$0xff]
  %v239 = vld [vmem:[%s5 + $0x38] sm:$0xff]
  %v240 = vld [vmem:[%s5 + $0x40] sm:$0xff]
  %v241 = vld [vmem:[%s5 + $0x48] sm:$0xff]
  %v242 = vld [vmem:[%s5 + $0x50] sm:$0xff]
  %v243 = vld [vmem:[%s5 + $0x58] sm:$0xff]
  %v244 = vld [vmem:[%s5 + $0x60] sm:$0xff]
  %v245 = vld [vmem:[%s5 + $0x68] sm:$0xff]
  %v246 = vld [vmem:[%s5 + $0x70] sm:$0xff]
  %v247 = vld [vmem:[%s5 + $0x78] sm:$0xff]
  %v248 = vld [vmem:[%s5 + $0x80] sm:$0xff]
  %v249 = vld [vmem:[%s5 + $0x88] sm:$0xff]
  %v250 = vld [vmem:[%s5 + $0x90] sm:$0xff]
  %v251 = vld [vmem:[%s5 + $0x98] sm:$0xff]
  %v252 = vld [vmem:[%s5 + $0xa0] sm:$0xff]
  %v253 = vld [vmem:[%s5 + $0xa8] sm:$0xff]
  %v254 = vld [vmem:[%s5 + $0xb0] sm:$0xff]
  %v255 = vld [vmem:[%s5 + $0xb8] sm:$0xff]
  %v256 = vld [vmem:[%s5 + $0xc0] sm:$0xff]
  %v257 = vld [vmem:[%s5 + $0xc8] sm:$0xff]
  %v258 = vld [vmem:[%s5 + $0xd0] sm:$0xff]
  %v259 = vld [vmem:[%s5 + $0xd8] sm:$0xff]
  %v260 = vld [vmem:[%s5 + $0xe0] sm:$0xff]
  %v261 = vld [vmem:[%s5 + $0xe8] sm:$0xff]
  %v262 = vld [vmem:[%s5 + $0xf0] sm:$0xff]
  %v263 = vld [vmem:[%s5 + $0xf8] sm:$0xff]
  %v264 = vld [vmem:[%s6] sm:$0xf]
  %v266 = vperm.slane %v264, 0
  %v267 = vperm.slane %v264, 1
  %v268 = vperm.slane %v264, 2
  %v269 = vperm.slane %v264, 3
  %v306 = vunpack.c.l.b16 %v232
  %v307 = vunpack.c.h.b16 %v232
  %v308 = vunpack.c.l.b16 %v233
  %v309 = vunpack.c.h.b16 %v233
  %v310 = vunpack.c.l.b16 %v234
  %v311 = vunpack.c.h.b16 %v234
  %v312 = vunpack.c.l.b16 %v235
  %v313 = vunpack.c.h.b16 %v235
  %v314 = vunpack.c.l.b16 %v236
  %v315 = vunpack.c.h.b16 %v236
  %v316 = vunpack.c.l.b16 %v237
  %v317 = vunpack.c.h.b16 %v237
  %v318 = vunpack.c.l.b16 %v238
  %v319 = vunpack.c.h.b16 %v238
  %v320 = vunpack.c.l.b16 %v239
  %v321 = vunpack.c.h.b16 %v239
  %v322 = vunpack.c.l.b16 %v240
  %v323 = vunpack.c.h.b16 %v240
  %v324 = vunpack.c.l.b16 %v241
  %v325 = vunpack.c.h.b16 %v241
  %v326 = vunpack.c.l.b16 %v242
  %v327 = vunpack.c.h.b16 %v242
  %v328 = vunpack.c.l.b16 %v243
  %v329 = vunpack.c.h.b16 %v243
  %v330 = vunpack.c.l.b16 %v244
  %v331 = vunpack.c.h.b16 %v244
  %v332 = vunpack.c.l.b16 %v245
  %v333 = vunpack.c.h.b16 %v245
  %v334 = vunpack.c.l.b16 %v246
  %v335 = vunpack.c.h.b16 %v246
  %v336 = vunpack.c.l.b16 %v247
  %v337 = vunpack.c.h.b16 %v247
  %v338 = vunpack.c.l.b16 %v248
  %v339 = vunpack.c.h.b16 %v248
  %v340 = vunpack.c.l.b16 %v249
  %v341 = vunpack.c.h.b16 %v249
  %v342 = vunpack.c.l.b16 %v250
  %v343 = vunpack.c.h.b16 %v250
  %v344 = vunpack.c.l.b16 %v251
  %v345 = vunpack.c.h.b16 %v251
  %v346 = vunpack.c.l.b16 %v252
  %v347 = vunpack.c.h.b16 %v252
  %v348 = vunpack.c.l.b16 %v253
  %v349 = vunpack.c.h.b16 %v253
  %v350 = vunpack.c.l.b16 %v254
  %v351 = vunpack.c.h.b16 %v254
  %v352 = vunpack.c.l.b16 %v255
  %v353 = vunpack.c.h.b16 %v255
  %v354 = vunpack.c.l.b16 %v256
  %v355 = vunpack.c.h.b16 %v256
  %v356 = vunpack.c.l.b16 %v257
  %v357 = vunpack.c.h.b16 %v257
  %v358 = vunpack.c.l.b16 %v258
  %v359 = vunpack.c.h.b16 %v258
  %v360 = vunpack.c.l.b16 %v259
  %v361 = vunpack.c.h.b16 %v259
  %v362 = vunpack.c.l.b16 %v260
  %v363 = vunpack.c.h.b16 %v260
  %v364 = vunpack.c.l.b16 %v261
  %v365 = vunpack.c.h.b16 %v261
  %v366 = vunpack.c.l.b16 %v262
  %v367 = vunpack.c.h.b16 %v262
  %v368 = vunpack.c.l.b16 %v263
  %v369 = vunpack.c.h.b16 %v263
  %v370 = vpack.c.b16 %v310, %v306
  %v371 = vpack.c.b16 %v311, %v307
  %v372 = vpack.c.b16 %v312, %v308
  %v373 = vpack.c.b16 %v313, %v309
  %v374 = vpack.c.b16 %v318, %v314
  %v375 = vpack.c.b16 %v319, %v315
  %v376 = vpack.c.b16 %v320, %v316
  %v377 = vpack.c.b16 %v321, %v317
  %v378 = vpack.c.b16 %v326, %v322
  %v379 = vpack.c.b16 %v327, %v323
  %v380 = vpack.c.b16 %v328, %v324
  %v381 = vpack.c.b16 %v329, %v325
  %v382 = vpack.c.b16 %v334, %v330
  %v383 = vpack.c.b16 %v335, %v331
  %v384 = vpack.c.b16 %v336, %v332
  %v385 = vpack.c.b16 %v337, %v333
  %v386 = vpack.c.b16 %v342, %v338
  %v387 = vpack.c.b16 %v343, %v339
  %v388 = vpack.c.b16 %v344, %v340
  %v389 = vpack.c.b16 %v345, %v341
  %v390 = vpack.c.b16 %v350, %v346
  %v391 = vpack.c.b16 %v351, %v347
  %v392 = vpack.c.b16 %v352, %v348
  %v393 = vpack.c.b16 %v353, %v349
  %v394 = vpack.c.b16 %v358, %v354
  %v395 = vpack.c.b16 %v359, %v355
  %v396 = vpack.c.b16 %v360, %v356
  %v397 = vpack.c.b16 %v361, %v357
  %v398 = vpack.c.b16 %v366, %v362
  %v399 = vpack.c.b16 %v367, %v363
  %v400 = vpack.c.b16 %v368, %v364
  %v401 = vpack.c.b16 %v369, %v365
  %434 = vmatpush.bf16.msra.mxu0 %v398
  %435 = vmatpush.bf16.msra.mxu0 %v394
  %436 = vmatpush.bf16.msra.mxu0 %v390
  %437 = vmatpush.bf16.msra.mxu0 %v386
  %438 = vmatpush.bf16.msra.mxu0 %v382
  %439 = vmatpush.bf16.msra.mxu0 %v378
  %440 = vmatpush.bf16.msra.mxu0 %v374
  %441 = vmatpush.bf16.msra.mxu0 %v370
  %442 = vmatmul.bf16.gmra.mxu0 %v228
  %v443 = vpop.f32.mrf.mxu0
  %v444 = vadd.f32 %v266, %v443
  %v445 = vpop.f32.mrf.mxu0
  %v446 = vadd.f32 %v266, %v445
  %447 = vmatmul.bf16.gmra.mxu0 %v229
  %v448 = vpop.f32.mrf.mxu0
  %v449 = vadd.f32 %v266, %v448
  %v450 = vpop.f32.mrf.mxu0
  %v451 = vadd.f32 %v266, %v450
  %452 = vmatmul.bf16.gmra.mxu0 %v230
  %v453 = vpop.f32.mrf.mxu0
  %v454 = vadd.f32 %v266, %v453
  %v455 = vpop.f32.mrf.mxu0
  %v456 = vadd.f32 %v266, %v455
  %457 = vmatmul.bf16.gmra.mxu0 %v231
  %v458 = vpop.f32.mrf.mxu0
  %v459 = vadd.f32 %v266, %v458
  %v460 = vpop.f32.mrf.mxu0
  %v461 = vadd.f32 %v266, %v460
  %462 = vdwg.mxu0
  %463 = vmatpush.bf16.msra.mxu0 %v399
  %464 = vmatpush.bf16.msra.mxu0 %v395
  %465 = vmatpush.bf16.msra.mxu0 %v391
  %466 = vmatpush.bf16.msra.mxu0 %v387
  %467 = vmatpush.bf16.msra.mxu0 %v383
  %468 = vmatpush.bf16.msra.mxu0 %v379
  %469 = vmatpush.bf16.msra.mxu0 %v375
  %470 = vmatpush.bf16.msra.mxu0 %v371
  %471 = vmatmul.bf16.gmra.mxu0 %v228
  %v472 = vpop.f32.mrf.mxu0
  %v473 = vadd.f32 %v267, %v472
  %v474 = vpop.f32.mrf.mxu0
  %v475 = vadd.f32 %v267, %v474
  %476 = vmatmul.bf16.gmra.mxu0 %v229
  %v477 = vpop.f32.mrf.mxu0
  %v478 = vadd.f32 %v267, %v477
  %v479 = vpop.f32.mrf.mxu0
  %v480 = vadd.f32 %v267, %v479
  %481 = vmatmul.bf16.gmra.mxu0 %v230
  %v482 = vpop.f32.mrf.mxu0
  %v483 = vadd.f32 %v267, %v482
  %v484 = vpop.f32.mrf.mxu0
  %v485 = vadd.f32 %v267, %v484
  %486 = vmatmul.bf16.gmra.mxu0 %v231
  %v487 = vpop.f32.mrf.mxu0
  %v488 = vadd.f32 %v267, %v487
  %v489 = vpop.f32.mrf.mxu0
  %v490 = vadd.f32 %v267, %v489
  %491 = vdwg.mxu0
  %492 = vmatpush.bf16.msra.mxu0 %v400
  %493 = vmatpush.bf16.msra.mxu0 %v396
  %494 = vmatpush.bf16.msra.mxu0 %v392
  %495 = vmatpush.bf16.msra.mxu0 %v388
  %496 = vmatpush.bf16.msra.mxu0 %v384
  %497 = vmatpush.bf16.msra.mxu0 %v380
  %498 = vmatpush.bf16.msra.mxu0 %v376
  %499 = vmatpush.bf16.msra.mxu0 %v372
  %500 = vmatmul.bf16.gmra.mxu0 %v228
  %v501 = vpop.f32.mrf.mxu0
  %v502 = vadd.f32 %v268, %v501
  %v503 = vpop.f32.mrf.mxu0
  %v504 = vadd.f32 %v268, %v503
  %505 = vmatmul.bf16.gmra.mxu0 %v229
  %v506 = vpop.f32.mrf.mxu0
  %v507 = vadd.f32 %v268, %v506
  %v508 = vpop.f32.mrf.mxu0
  %v509 = vadd.f32 %v268, %v508
  %510 = vmatmul.bf16.gmra.mxu0 %v230
  %v511 = vpop.f32.mrf.mxu0
  %v512 = vadd.f32 %v268, %v511
  %v513 = vpop.f32.mrf.mxu0
  %v514 = vadd.f32 %v268, %v513
  %515 = vmatmul.bf16.gmra.mxu0 %v231
  %v516 = vpop.f32.mrf.mxu0
  %v517 = vadd.f32 %v268, %v516
  %v518 = vpop.f32.mrf.mxu0
  %v519 = vadd.f32 %v268, %v518
  %520 = vdwg.mxu0
  %521 = vmatpush.bf16.msra.mxu0 %v401
  %522 = vmatpush.bf16.msra.mxu0 %v397
  %523 = vmatpush.bf16.msra.mxu0 %v393
  %524 = vmatpush.bf16.msra.mxu0 %v389
  %525 = vmatpush.bf16.msra.mxu0 %v385
  %526 = vmatpush.bf16.msra.mxu0 %v381
  %527 = vmatpush.bf16.msra.mxu0 %v377
  %528 = vmatpush.bf16.msra.mxu0 %v373
  %529 = vmatmul.bf16.gmra.mxu0 %v228
  %v530 = vpop.f32.mrf.mxu0
  %v531 = vadd.f32 %v269, %v530
  %v532 = vpop.f32.mrf.mxu0
  %v533 = vadd.f32 %v269, %v532
  %534 = vmatmul.bf16.gmra.mxu0 %v229
  %v535 = vpop.f32.mrf.mxu0
  %v536 = vadd.f32 %v269, %v535
  %v537 = vpop.f32.mrf.mxu0
  %v538 = vadd.f32 %v269, %v537
  %539 = vmatmul.bf16.gmra.mxu0 %v230
  %v540 = vpop.f32.mrf.mxu0
  %v541 = vadd.f32 %v269, %v540
  %v542 = vpop.f32.mrf.mxu0
  %v543 = vadd.f32 %v269, %v542
  %544 = vmatmul.bf16.gmra.mxu0 %v231
  %v545 = vpop.f32.mrf.mxu0
  %v546 = vadd.f32 %v269, %v545
  %v547 = vpop.f32.mrf.mxu0
  %v548 = vadd.f32 %v269, %v547
  %549 = vdwg.mxu0
  %v550 = vmul.f32 %v444, 0.5
  %v551 = vmul.f32 %v473, 0.5
  %v552 = vmul.f32 %v502, 0.5
  %v553 = vmul.f32 %v531, 0.5
  %v554 = vmul.f32 %v446, 0.5
  %v555 = vmul.f32 %v475, 0.5
  %v556 = vmul.f32 %v504, 0.5
  %v557 = vmul.f32 %v533, 0.5
  %v558 = vmul.f32 %v449, 0.5
  %v559 = vmul.f32 %v478, 0.5
  %v560 = vmul.f32 %v507, 0.5
  %v561 = vmul.f32 %v536, 0.5
  %v562 = vmul.f32 %v451, 0.5
  %v563 = vmul.f32 %v480, 0.5
  %v564 = vmul.f32 %v509, 0.5
  %v565 = vmul.f32 %v538, 0.5
  %v566 = vmul.f32 %v454, 0.5
  %v567 = vmul.f32 %v483, 0.5
  %v568 = vmul.f32 %v512, 0.5
  %v569 = vmul.f32 %v541, 0.5
  %v570 = vmul.f32 %v456, 0.5
  %v571 = vmul.f32 %v485, 0.5
  %v572 = vmul.f32 %v514, 0.5
  %v573 = vmul.f32 %v543, 0.5
  %v574 = vmul.f32 %v459, 0.5
  %v575 = vmul.f32 %v488, 0.5
  %v576 = vmul.f32 %v517, 0.5
  %v577 = vmul.f32 %v546, 0.5
  %v578 = vmul.f32 %v461, 0.5
  %v579 = vmul.f32 %v490, 0.5
  %v580 = vmul.f32 %v519, 0.5
  %v581 = vmul.f32 %v548, 0.5
  %v582 = vmul.f32 %v444, %v444
  %v583 = vmul.f32 %v473, %v473
  %v584 = vmul.f32 %v502, %v502
  %v585 = vmul.f32 %v531, %v531
  %v586 = vmul.f32 %v446, %v446
  %v587 = vmul.f32 %v475, %v475
  %v588 = vmul.f32 %v504, %v504
  %v589 = vmul.f32 %v533, %v533
  %v590 = vmul.f32 %v449, %v449
  %v591 = vmul.f32 %v478, %v478
  %v592 = vmul.f32 %v507, %v507
  %v593 = vmul.f32 %v536, %v536
  %v594 = vmul.f32 %v451, %v451
  %v595 = vmul.f32 %v480, %v480
  %v596 = vmul.f32 %v509, %v509
  %v597 = vmul.f32 %v538, %v538
  %v598 = vmul.f32 %v454, %v454
  %v599 = vmul.f32 %v483, %v483
  %v600 = vmul.f32 %v512, %v512
  %v601 = vmul.f32 %v541, %v541
  %v602 = vmul.f32 %v456, %v456
  %v603 = vmul.f32 %v485, %v485
  %v604 = vmul.f32 %v514, %v514
  %v605 = vmul.f32 %v543, %v543
  %v606 = vmul.f32 %v459, %v459
  %v607 = vmul.f32 %v488, %v488
  %v608 = vmul.f32 %v517, %v517
  %v609 = vmul.f32 %v546, %v546
  %v610 = vmul.f32 %v461, %v461
  %v611 = vmul.f32 %v490, %v490
  %v612 = vmul.f32 %v519, %v519
  %v613 = vmul.f32 %v548, %v548
  %v614 = vmul.f32 %v582, %v444
  %v615 = vmul.f32 %v583, %v473
  %v616 = vmul.f32 %v584, %v502
  %v617 = vmul.f32 %v585, %v531
  %v618 = vmul.f32 %v586, %v446
  %v619 = vmul.f32 %v587, %v475
  %v620 = vmul.f32 %v588, %v504
  %v621 = vmul.f32 %v589, %v533
  %v622 = vmul.f32 %v590, %v449
  %v623 = vmul.f32 %v591, %v478
  %v624 = vmul.f32 %v592, %v507
  %v625 = vmul.f32 %v593, %v536
  %v626 = vmul.f32 %v594, %v451
  %v627 = vmul.f32 %v595, %v480
  %v628 = vmul.f32 %v596, %v509
  %v629 = vmul.f32 %v597, %v538
  %v630 = vmul.f32 %v598, %v454
  %v631 = vmul.f32 %v599, %v483
  %v632 = vmul.f32 %v600, %v512
  %v633 = vmul.f32 %v601, %v541
  %v634 = vmul.f32 %v602, %v456
  %v635 = vmul.f32 %v603, %v485
  %v636 = vmul.f32 %v604, %v514
  %v637 = vmul.f32 %v605, %v543
  %v638 = vmul.f32 %v606, %v459
  %v639 = vmul.f32 %v607, %v488
  %v640 = vmul.f32 %v608, %v517
  %v641 = vmul.f32 %v609, %v546
  %v642 = vmul.f32 %v610, %v461
  %v643 = vmul.f32 %v611, %v490
  %v644 = vmul.f32 %v612, %v519
  %v645 = vmul.f32 %v613, %v548
  %v646 = vmul.f32 %v614, 0.044715
  %v647 = vmul.f32 %v615, 0.044715
  %v648 = vmul.f32 %v616, 0.044715
  %v649 = vmul.f32 %v617, 0.044715
  %v650 = vmul.f32 %v618, 0.044715
  %v651 = vmul.f32 %v619, 0.044715
  %v652 = vmul.f32 %v620, 0.044715
  %v653 = vmul.f32 %v621, 0.044715
  %v654 = vmul.f32 %v622, 0.044715
  %v655 = vmul.f32 %v623, 0.044715
  %v656 = vmul.f32 %v624, 0.044715
  %v657 = vmul.f32 %v625, 0.044715
  %v658 = vmul.f32 %v626, 0.044715
  %v659 = vmul.f32 %v627, 0.044715
  %v660 = vmul.f32 %v628, 0.044715
  %v661 = vmul.f32 %v629, 0.044715
  %v662 = vmul.f32 %v630, 0.044715
  %v663 = vmul.f32 %v631, 0.044715
  %v664 = vmul.f32 %v632, 0.044715
  %v665 = vmul.f32 %v633, 0.044715
  %v666 = vmul.f32 %v634, 0.044715
  %v667 = vmul.f32 %v635, 0.044715
  %v668 = vmul.f32 %v636, 0.044715
  %v669 = vmul.f32 %v637, 0.044715
  %v670 = vmul.f32 %v638, 0.044715
  %v671 = vmul.f32 %v639, 0.044715
  %v672 = vmul.f32 %v640, 0.044715
  %v673 = vmul.f32 %v641, 0.044715
  %v674 = vmul.f32 %v642, 0.044715
  %v675 = vmul.f32 %v643, 0.044715
  %v676 = vmul.f32 %v644, 0.044715
  %v677 = vmul.f32 %v645, 0.044715
  %v678 = vadd.f32 %v444, %v646
  %v679 = vadd.f32 %v473, %v647
  %v680 = vadd.f32 %v502, %v648
  %v681 = vadd.f32 %v531, %v649
  %v682 = vadd.f32 %v446, %v650
  %v683 = vadd.f32 %v475, %v651
  %v684 = vadd.f32 %v504, %v652
  %v685 = vadd.f32 %v533, %v653
  %v686 = vadd.f32 %v449, %v654
  %v687 = vadd.f32 %v478, %v655
  %v688 = vadd.f32 %v507, %v656
  %v689 = vadd.f32 %v536, %v657
  %v690 = vadd.f32 %v451, %v658
  %v691 = vadd.f32 %v480, %v659
  %v692 = vadd.f32 %v509, %v660
  %v693 = vadd.f32 %v538, %v661
  %v694 = vadd.f32 %v454, %v662
  %v695 = vadd.f32 %v483, %v663
  %v696 = vadd.f32 %v512, %v664
  %v697 = vadd.f32 %v541, %v665
  %v698 = vadd.f32 %v456, %v666
  %v699 = vadd.f32 %v485, %v667
  %v700 = vadd.f32 %v514, %v668
  %v701 = vadd.f32 %v543, %v669
  %v702 = vadd.f32 %v459, %v670
  %v703 = vadd.f32 %v488, %v671
  %v704 = vadd.f32 %v517, %v672
  %v705 = vadd.f32 %v546, %v673
  %v706 = vadd.f32 %v461, %v674
  %v707 = vadd.f32 %v490, %v675
  %v708 = vadd.f32 %v519, %v676
  %v709 = vadd.f32 %v548, %v677
  %v710 = vmul.f32 %v678, 0.7978846
  %v711 = vmul.f32 %v679, 0.7978846
  %v712 = vmul.f32 %v680, 0.7978846
  %v713 = vmul.f32 %v681, 0.7978846
  %v714 = vmul.f32 %v682, 0.7978846
  %v715 = vmul.f32 %v683, 0.7978846
  %v716 = vmul.f32 %v684, 0.7978846
  %v717 = vmul.f32 %v685, 0.7978846
  %v718 = vmul.f32 %v686, 0.7978846
  %v719 = vmul.f32 %v687, 0.7978846
  %v720 = vmul.f32 %v688, 0.7978846
  %v721 = vmul.f32 %v689, 0.7978846
  %v722 = vmul.f32 %v690, 0.7978846
  %v723 = vmul.f32 %v691, 0.7978846
  %v724 = vmul.f32 %v692, 0.7978846
  %v725 = vmul.f32 %v693, 0.7978846
  %v726 = vmul.f32 %v694, 0.7978846
  %v727 = vmul.f32 %v695, 0.7978846
  %v728 = vmul.f32 %v696, 0.7978846
  %v729 = vmul.f32 %v697, 0.7978846
  %v730 = vmul.f32 %v698, 0.7978846
  %v731 = vmul.f32 %v699, 0.7978846
  %v732 = vmul.f32 %v700, 0.7978846
  %v733 = vmul.f32 %v701, 0.7978846
  %v734 = vmul.f32 %v702, 0.7978846
  %v735 = vmul.f32 %v703, 0.7978846
  %v736 = vmul.f32 %v704, 0.7978846
  %v737 = vmul.f32 %v705, 0.7978846
  %v738 = vmul.f32 %v706, 0.7978846
  %v739 = vmul.f32 %v707, 0.7978846
  %v740 = vmul.f32 %v708, 0.7978846
  %v741 = vmul.f32 %v709, 0.7978846
  %v742 = vtanh.pop %v710
  %v743 = vtanh.pop %v711
  %v744 = vtanh.pop %v712
  %v745 = vtanh.pop %v713
  %v746 = vtanh.pop %v714
  %v747 = vtanh.pop %v715
  %v748 = vtanh.pop %v716
  %v749 = vtanh.pop %v717
  %v750 = vtanh.pop %v718
  %v751 = vtanh.pop %v719
  %v752 = vtanh.pop %v720
  %v753 = vtanh.pop %v721
  %v754 = vtanh.pop %v722
  %v755 = vtanh.pop %v723
  %v756 = vtanh.pop %v724
  %v757 = vtanh.pop %v725
  %v758 = vtanh.pop %v726
  %v759 = vtanh.pop %v727
  %v760 = vtanh.pop %v728
  %v761 = vtanh.pop %v729
  %v762 = vtanh.pop %v730
  %v763 = vtanh.pop %v731
  %v764 = vtanh.pop %v732
  %v765 = vtanh.pop %v733
  %v766 = vtanh.pop %v734
  %v767 = vtanh.pop %v735
  %v768 = vtanh.pop %v736
  %v769 = vtanh.pop %v737
  %v770 = vtanh.pop %v738
  %v771 = vtanh.pop %v739
  %v772 = vtanh.pop %v740
  %v773 = vtanh.pop %v741
  %v774 = vadd.f32 %v742, 1.0
  %v775 = vadd.f32 %v743, 1.0
  %v776 = vadd.f32 %v744, 1.0
  %v777 = vadd.f32 %v745, 1.0
  %v778 = vadd.f32 %v746, 1.0
  %v779 = vadd.f32 %v747, 1.0
  %v780 = vadd.f32 %v748, 1.0
  %v781 = vadd.f32 %v749, 1.0
  %v782 = vadd.f32 %v750, 1.0
  %v783 = vadd.f32 %v751, 1.0
  %v784 = vadd.f32 %v752, 1.0
  %v785 = vadd.f32 %v753, 1.0
  %v786 = vadd.f32 %v754, 1.0
  %v787 = vadd.f32 %v755, 1.0
  %v788 = vadd.f32 %v756, 1.0
  %v789 = vadd.f32 %v757, 1.0
  %v790 = vadd.f32 %v758, 1.0
  %v791 = vadd.f32 %v759, 1.0
  %v792 = vadd.f32 %v760, 1.0
  %v793 = vadd.f32 %v761, 1.0
  %v794 = vadd.f32 %v762, 1.0
  %v795 = vadd.f32 %v763, 1.0
  %v796 = vadd.f32 %v764, 1.0
  %v797 = vadd.f32 %v765, 1.0
  %v798 = vadd.f32 %v766, 1.0
  %v799 = vadd.f32 %v767, 1.0
  %v800 = vadd.f32 %v768, 1.0
  %v801 = vadd.f32 %v769, 1.0
  %v802 = vadd.f32 %v770, 1.0
  %v803 = vadd.f32 %v771, 1.0
  %v804 = vadd.f32 %v772, 1.0
  %v805 = vadd.f32 %v773, 1.0
  %v806 = vmul.f32 %v550, %v774
  %v807 = vmul.f32 %v551, %v775
  %v808 = vmul.f32 %v552, %v776
  %v809 = vmul.f32 %v553, %v777
  %v810 = vmul.f32 %v554, %v778
  %v811 = vmul.f32 %v555, %v779
  %v812 = vmul.f32 %v556, %v780
  %v813 = vmul.f32 %v557, %v781
  %v814 = vmul.f32 %v558, %v782
  %v815 = vmul.f32 %v559, %v783
  %v816 = vmul.f32 %v560, %v784
  %v817 = vmul.f32 %v561, %v785
  %v818 = vmul.f32 %v562, %v786
  %v819 = vmul.f32 %v563, %v787
  %v820 = vmul.f32 %v564, %v788
  %v821 = vmul.f32 %v565, %v789
  %v822 = vmul.f32 %v566, %v790
  %v823 = vmul.f32 %v567, %v791
  %v824 = vmul.f32 %v568, %v792
  %v825 = vmul.f32 %v569, %v793
  %v826 = vmul.f32 %v570, %v794
  %v827 = vmul.f32 %v571, %v795
  %v828 = vmul.f32 %v572, %v796
  %v829 = vmul.f32 %v573, %v797
  %v830 = vmul.f32 %v574, %v798
  %v831 = vmul.f32 %v575, %v799
  %v832 = vmul.f32 %v576, %v800
  %v833 = vmul.f32 %v577, %v801
  %v834 = vmul.f32 %v578, %v802
  %v835 = vmul.f32 %v579, %v803
  %v836 = vmul.f32 %v580, %v804
  %v837 = vmul.f32 %v581, %v805
  %v838 = vpack.c.bf16 %v810, %v806
  %v839 = vpack.c.bf16 %v811, %v807
  %v840 = vpack.c.bf16 %v812, %v808
  %v841 = vpack.c.bf16 %v813, %v809
  %v842 = vpack.c.bf16 %v818, %v814
  %v843 = vpack.c.bf16 %v819, %v815
  %v844 = vpack.c.bf16 %v820, %v816
  %v845 = vpack.c.bf16 %v821, %v817
  %v846 = vpack.c.bf16 %v826, %v822
  %v847 = vpack.c.bf16 %v827, %v823
  %v848 = vpack.c.bf16 %v828, %v824
  %v849 = vpack.c.bf16 %v829, %v825
  %v850 = vpack.c.bf16 %v834, %v830
  %v851 = vpack.c.bf16 %v835, %v831
  %v852 = vpack.c.bf16 %v836, %v832
  %v853 = vpack.c.bf16 %v837, %v833
  %v854 = vld [vmem:[%s7] sm:$0xf]
  %v855 = vld [vmem:[%s7 + $0x4] sm:$0xf]
  %v856 = vld [vmem:[%s7 + $0x8] sm:$0xf]
  %v857 = vld [vmem:[%s7 + $0xc] sm:$0xf]
  %v858 = vld [vmem:[%s7 + $0x10] sm:$0xf]
  %v859 = vld [vmem:[%s7 + $0x14] sm:$0xf]
  %v860 = vld [vmem:[%s7 + $0x18] sm:$0xf]
  %v861 = vld [vmem:[%s7 + $0x1c] sm:$0xf]
  %v862 = vld [vmem:[%s7 + $0x20] sm:$0xf]
  %v863 = vld [vmem:[%s7 + $0x24] sm:$0xf]
  %v864 = vld [vmem:[%s7 + $0x28] sm:$0xf]
  %v865 = vld [vmem:[%s7 + $0x2c] sm:$0xf]
  %v866 = vld [vmem:[%s7 + $0x30] sm:$0xf]
  %v867 = vld [vmem:[%s7 + $0x34] sm:$0xf]
  %v868 = vld [vmem:[%s7 + $0x38] sm:$0xf]
  %v869 = vld [vmem:[%s7 + $0x3c] sm:$0xf]
  %v870 = vld [vmem:[%s7 + $0x40] sm:$0xf]
  %v871 = vld [vmem:[%s7 + $0x44] sm:$0xf]
  %v872 = vld [vmem:[%s7 + $0x48] sm:$0xf]
  %v873 = vld [vmem:[%s7 + $0x4c] sm:$0xf]
  %v874 = vld [vmem:[%s7 + $0x50] sm:$0xf]
  %v875 = vld [vmem:[%s7 + $0x54] sm:$0xf]
  %v876 = vld [vmem:[%s7 + $0x58] sm:$0xf]
  %v877 = vld [vmem:[%s7 + $0x5c] sm:$0xf]
  %v878 = vld [vmem:[%s7 + $0x60] sm:$0xf]
  %v879 = vld [vmem:[%s7 + $0x64] sm:$0xf]
  %v880 = vld [vmem:[%s7 + $0x68] sm:$0xf]
  %v881 = vld [vmem:[%s7 + $0x6c] sm:$0xf]
  %v882 = vld [vmem:[%s7 + $0x70] sm:$0xf]
  %v883 = vld [vmem:[%s7 + $0x74] sm:$0xf]
  %v884 = vld [vmem:[%s7 + $0x78] sm:$0xf]
  %v885 = vld [vmem:[%s7 + $0x7c] sm:$0xf]
  %v886 = vld [vmem:[%s7 + $0x80] sm:$0xf]
  %v887 = vld [vmem:[%s7 + $0x84] sm:$0xf]
  %v888 = vld [vmem:[%s7 + $0x88] sm:$0xf]
  %v889 = vld [vmem:[%s7 + $0x8c] sm:$0xf]
  %v890 = vld [vmem:[%s7 + $0x90] sm:$0xf]
  %v891 = vld [vmem:[%s7 + $0x94] sm:$0xf]
  %v892 = vld [vmem:[%s7 + $0x98] sm:$0xf]
  %v893 = vld [vmem:[%s7 + $0x9c] sm:$0xf]
  %v894 = vld [vmem:[%s7 + $0xa0] sm:$0xf]
  %v895 = vld [vmem:[%s7 + $0xa4] sm:$0xf]
  %v896 = vld [vmem:[%s7 + $0xa8] sm:$0xf]
  %v897 = vld [vmem:[%s7 + $0xac] sm:$0xf]
  %v898 = vld [vmem:[%s7 + $0xb0] sm:$0xf]
  %v899 = vld [vmem:[%s7 + $0xb4] sm:$0xf]
  %v900 = vld [vmem:[%s7 + $0xb8] sm:$0xf]
  %v901 = vld [vmem:[%s7 + $0xbc] sm:$0xf]
  %v902 = vld [vmem:[%s7 + $0xc0] sm:$0xf]
  %v903 = vld [vmem:[%s7 + $0xc4] sm:$0xf]
  %v904 = vld [vmem:[%s7 + $0xc8] sm:$0xf]
  %v905 = vld [vmem:[%s7 + $0xcc] sm:$0xf]
  %v906 = vld [vmem:[%s7 + $0xd0] sm:$0xf]
  %v907 = vld [vmem:[%s7 + $0xd4] sm:$0xf]
  %v908 = vld [vmem:[%s7 + $0xd8] sm:$0xf]
  %v909 = vld [vmem:[%s7 + $0xdc] sm:$0xf]
  %v910 = vld [vmem:[%s7 + $0xe0] sm:$0xf]
  %v911 = vld [vmem:[%s7 + $0xe4] sm:$0xf]
  %v912 = vld [vmem:[%s7 + $0xe8] sm:$0xf]
  %v913 = vld [vmem:[%s7 + $0xec] sm:$0xf]
  %v914 = vld [vmem:[%s7 + $0xf0] sm:$0xf]
  %v915 = vld [vmem:[%s7 + $0xf4] sm:$0xf]
  %v916 = vld [vmem:[%s7 + $0xf8] sm:$0xf]
  %v917 = vld [vmem:[%s7 + $0xfc] sm:$0xf]
  %v918 = vld [vmem:[%s8] sm:$0x1]
  %v920 = vperm.slane %v918, 0
  %v986 = vunpack.c.l.b16 %v854
  %v987 = vunpack.c.l.b16 %v855
  %v988 = vunpack.c.l.b16 %v856
  %v989 = vunpack.c.l.b16 %v857
  %v990 = vunpack.c.l.b16 %v858
  %v991 = vunpack.c.l.b16 %v859
  %v992 = vunpack.c.l.b16 %v860
  %v993 = vunpack.c.l.b16 %v861
  %v994 = vunpack.c.l.b16 %v862
  %v995 = vunpack.c.l.b16 %v863
  %v996 = vunpack.c.l.b16 %v864
  %v997 = vunpack.c.l.b16 %v865
  %v998 = vunpack.c.l.b16 %v866
  %v999 = vunpack.c.l.b16 %v867
  %v1000 = vunpack.c.l.b16 %v868
  %v1001 = vunpack.c.l.b16 %v869
  %v1002 = vunpack.c.l.b16 %v870
  %v1003 = vunpack.c.l.b16 %v871
  %v1004 = vunpack.c.l.b16 %v872
  %v1005 = vunpack.c.l.b16 %v873
  %v1006 = vunpack.c.l.b16 %v874
  %v1007 = vunpack.c.l.b16 %v875
  %v1008 = vunpack.c.l.b16 %v876
  %v1009 = vunpack.c.l.b16 %v877
  %v1010 = vunpack.c.l.b16 %v878
  %v1011 = vunpack.c.l.b16 %v879
  %v1012 = vunpack.c.l.b16 %v880
  %v1013 = vunpack.c.l.b16 %v881
  %v1014 = vunpack.c.l.b16 %v882
  %v1015 = vunpack.c.l.b16 %v883
  %v1016 = vunpack.c.l.b16 %v884
  %v1017 = vunpack.c.l.b16 %v885
  %v1018 = vunpack.c.l.b16 %v886
  %v1019 = vunpack.c.l.b16 %v887
  %v1020 = vunpack.c.l.b16 %v888
  %v1021 = vunpack.c.l.b16 %v889
  %v1022 = vunpack.c.l.b16 %v890
  %v1023 = vunpack.c.l.b16 %v891
  %v1024 = vunpack.c.l.b16 %v892
  %v1025 = vunpack.c.l.b16 %v893
  %v1026 = vunpack.c.l.b16 %v894
  %v1027 = vunpack.c.l.b16 %v895
  %v1028 = vunpack.c.l.b16 %v896
  %v1029 = vunpack.c.l.b16 %v897
  %v1030 = vunpack.c.l.b16 %v898
  %v1031 = vunpack.c.l.b16 %v899
  %v1032 = vunpack.c.l.b16 %v900
  %v1033 = vunpack.c.l.b16 %v901
  %v1034 = vunpack.c.l.b16 %v902
  %v1035 = vunpack.c.l.b16 %v903
  %v1036 = vunpack.c.l.b16 %v904
  %v1037 = vunpack.c.l.b16 %v905
  %v1038 = vunpack.c.l.b16 %v906
  %v1039 = vunpack.c.l.b16 %v907
  %v1040 = vunpack.c.l.b16 %v908
  %v1041 = vunpack.c.l.b16 %v909
  %v1042 = vunpack.c.l.b16 %v910
  %v1043 = vunpack.c.l.b16 %v911
  %v1044 = vunpack.c.l.b16 %v912
  %v1045 = vunpack.c.l.b16 %v913
  %v1046 = vunpack.c.l.b16 %v914
  %v1047 = vunpack.c.l.b16 %v915
  %v1048 = vunpack.c.l.b16 %v916
  %v1049 = vunpack.c.l.b16 %v917
  %v1050 = vpack.c.b16 %v987, %v986
  %v1051 = vpack.c.b16 %v989, %v988
  %v1052 = vpack.c.b16 %v991, %v990
  %v1053 = vpack.c.b16 %v993, %v992
  %v1054 = vpack.c.b16 %v995, %v994
  %v1055 = vpack.c.b16 %v997, %v996
  %v1056 = vpack.c.b16 %v999, %v998
  %v1057 = vpack.c.b16 %v1001, %v1000
  %v1058 = vpack.c.b16 %v1003, %v1002
  %v1059 = vpack.c.b16 %v1005, %v1004
  %v1060 = vpack.c.b16 %v1007, %v1006
  %v1061 = vpack.c.b16 %v1009, %v1008
  %v1062 = vpack.c.b16 %v1011, %v1010
  %v1063 = vpack.c.b16 %v1013, %v1012
  %v1064 = vpack.c.b16 %v1015, %v1014
  %v1065 = vpack.c.b16 %v1017, %v1016
  %v1066 = vpack.c.b16 %v1019, %v1018
  %v1067 = vpack.c.b16 %v1021, %v1020
  %v1068 = vpack.c.b16 %v1023, %v1022
  %v1069 = vpack.c.b16 %v1025, %v1024
  %v1070 = vpack.c.b16 %v1027, %v1026
  %v1071 = vpack.c.b16 %v1029, %v1028
  %v1072 = vpack.c.b16 %v1031, %v1030
  %v1073 = vpack.c.b16 %v1033, %v1032
  %v1074 = vpack.c.b16 %v1035, %v1034
  %v1075 = vpack.c.b16 %v1037, %v1036
  %v1076 = vpack.c.b16 %v1039, %v1038
  %v1077 = vpack.c.b16 %v1041, %v1040
  %v1078 = vpack.c.b16 %v1043, %v1042
  %v1079 = vpack.c.b16 %v1045, %v1044
  %v1080 = vpack.c.b16 %v1047, %v1046
  %v1081 = vpack.c.b16 %v1049, %v1048
  %1114 = vmatpush.bf16.msra.mxu0 %v1057
  %1115 = vmatpush.bf16.msra.mxu0 %v1056
  %1116 = vmatpush.bf16.msra.mxu0 %v1055
  %1117 = vmatpush.bf16.msra.mxu0 %v1054
  %1118 = vmatpush.bf16.msra.mxu0 %v1053
  %1119 = vmatpush.bf16.msra.mxu0 %v1052
  %1120 = vmatpush.bf16.msra.mxu0 %v1051
  %1121 = vmatpush.bf16.msra.mxu0 %v1050
  %1122 = vmatmul.bf16.gmra.mxu0 %v838
  %v1123 = vpop.f32.mrf.mxu0
  %v1124 = vadd.f32 %v920, %v1123
  %v1125 = vpop.f32.mrf.mxu0
  %v1126 = vadd.f32 %v920, %v1125
  %1127 = vmatmul.bf16.gmra.mxu0 %v842
  %v1128 = vpop.f32.mrf.mxu0
  %v1129 = vadd.f32 %v920, %v1128
  %v1130 = vpop.f32.mrf.mxu0
  %v1131 = vadd.f32 %v920, %v1130
  %1132 = vmatmul.bf16.gmra.mxu0 %v846
  %v1133 = vpop.f32.mrf.mxu0
  %v1134 = vadd.f32 %v920, %v1133
  %v1135 = vpop.f32.mrf.mxu0
  %v1136 = vadd.f32 %v920, %v1135
  %1137 = vmatmul.bf16.gmra.mxu0 %v850
  %v1138 = vpop.f32.mrf.mxu0
  %v1139 = vadd.f32 %v920, %v1138
  %v1140 = vpop.f32.mrf.mxu0
  %v1141 = vadd.f32 %v920, %v1140
  %1142 = vdwg.mxu0
  %1143 = vmatpush.bf16.msra.mxu0 %v1065
  %1144 = vmatpush.bf16.msra.mxu0 %v1064
  %1145 = vmatpush.bf16.msra.mxu0 %v1063
  %1146 = vmatpush.bf16.msra.mxu0 %v1062
  %1147 = vmatpush.bf16.msra.mxu0 %v1061
  %1148 = vmatpush.bf16.msra.mxu0 %v1060
  %1149 = vmatpush.bf16.msra.mxu0 %v1059
  %1150 = vmatpush.bf16.msra.mxu0 %v1058
  %1151 = vmatmul.bf16.gmra.mxu0 %v839
  %v1152 = vpop.f32.mrf.mxu0
  %v1153 = vadd.f32 %v1124, %v1152
  %v1154 = vpop.f32.mrf.mxu0
  %v1155 = vadd.f32 %v1126, %v1154
  %1156 = vmatmul.bf16.gmra.mxu0 %v843
  %v1157 = vpop.f32.mrf.mxu0
  %v1158 = vadd.f32 %v1129, %v1157
  %v1159 = vpop.f32.mrf.mxu0
  %v1160 = vadd.f32 %v1131, %v1159
  %1161 = vmatmul.bf16.gmra.mxu0 %v847
  %v1162 = vpop.f32.mrf.mxu0
  %v1163 = vadd.f32 %v1134, %v1162
  %v1164 = vpop.f32.mrf.mxu0
  %v1165 = vadd.f32 %v1136, %v1164
  %1166 = vmatmul.bf16.gmra.mxu0 %v851
  %v1167 = vpop.f32.mrf.mxu0
  %v1168 = vadd.f32 %v1139, %v1167
  %v1169 = vpop.f32.mrf.mxu0
  %v1170 = vadd.f32 %v1141, %v1169
  %1171 = vdwg.mxu0
  %1172 = vmatpush.bf16.msra.mxu0 %v1073
  %1173 = vmatpush.bf16.msra.mxu0 %v1072
  %1174 = vmatpush.bf16.msra.mxu0 %v1071
  %1175 = vmatpush.bf16.msra.mxu0 %v1070
  %1176 = vmatpush.bf16.msra.mxu0 %v1069
  %1177 = vmatpush.bf16.msra.mxu0 %v1068
  %1178 = vmatpush.bf16.msra.mxu0 %v1067
  %1179 = vmatpush.bf16.msra.mxu0 %v1066
  %1180 = vmatmul.bf16.gmra.mxu0 %v840
  %v1181 = vpop.f32.mrf.mxu0
  %v1182 = vadd.f32 %v1153, %v1181
  %v1183 = vpop.f32.mrf.mxu0
  %v1184 = vadd.f32 %v1155, %v1183
  %1185 = vmatmul.bf16.gmra.mxu0 %v844
  %v1186 = vpop.f32.mrf.mxu0
  %v1187 = vadd.f32 %v1158, %v1186
  %v1188 = vpop.f32.mrf.mxu0
  %v1189 = vadd.f32 %v1160, %v1188
  %1190 = vmatmul.bf16.gmra.mxu0 %v848
  %v1191 = vpop.f32.mrf.mxu0
  %v1192 = vadd.f32 %v1163, %v1191
  %v1193 = vpop.f32.mrf.mxu0
  %v1194 = vadd.f32 %v1165, %v1193
  %1195 = vmatmul.bf16.gmra.mxu0 %v852
  %v1196 = vpop.f32.mrf.mxu0
  %v1197 = vadd.f32 %v1168, %v1196
  %v1198 = vpop.f32.mrf.mxu0
  %v1199 = vadd.f32 %v1170, %v1198
  %1200 = vdwg.mxu0
  %1201 = vmatpush.bf16.msra.mxu0 %v1081
  %1202 = vmatpush.bf16.msra.mxu0 %v1080
  %1203 = vmatpush.bf16.msra.mxu0 %v1079
  %1204 = vmatpush.bf16.msra.mxu0 %v1078
  %1205 = vmatpush.bf16.msra.mxu0 %v1077
  %1206 = vmatpush.bf16.msra.mxu0 %v1076
  %1207 = vmatpush.bf16.msra.mxu0 %v1075
  %1208 = vmatpush.bf16.msra.mxu0 %v1074
  %1209 = vmatmul.bf16.gmra.mxu0 %v841
  %v1210 = vpop.f32.mrf.mxu0
  %v1211 = vadd.f32 %v1182, %v1210
  %v1212 = vpop.f32.mrf.mxu0
  %v1213 = vadd.f32 %v1184, %v1212
  %1214 = vmatmul.bf16.gmra.mxu0 %v845
  %v1215 = vpop.f32.mrf.mxu0
  %v1216 = vadd.f32 %v1187, %v1215
  %v1217 = vpop.f32.mrf.mxu0
  %v1218 = vadd.f32 %v1189, %v1217
  %1219 = vmatmul.bf16.gmra.mxu0 %v849
  %v1220 = vpop.f32.mrf.mxu0
  %v1221 = vadd.f32 %v1192, %v1220
  %v1222 = vpop.f32.mrf.mxu0
  %v1223 = vadd.f32 %v1194, %v1222
  %1224 = vmatmul.bf16.gmra.mxu0 %v853
  %v1225 = vpop.f32.mrf.mxu0
  %v1226 = vadd.f32 %v1197, %v1225
  %v1227 = vpop.f32.mrf.mxu0
  %v1228 = vadd.f32 %v1199, %v1227
  %1229 = vdwg.mxu0
  %v1230 = vadd.f32 %v220, %v1211
  %v1231 = vadd.f32 %v221, %v1213
  %v1232 = vadd.f32 %v222, %v1216
  %v1233 = vadd.f32 %v223, %v1218
  %v1234 = vadd.f32 %v224, %v1221
  %v1235 = vadd.f32 %v225, %v1223
  %v1236 = vadd.f32 %v226, %v1226
  %v1237 = vadd.f32 %v227, %v1228
  %v1238 = vld [vmem:[%s9] sm:$0x1]
  %v1239 = vld [vmem:[%s10] sm:$0x1]
  %v1240 = vadd.f32 %v1230, %v1231
  %v1241 = vadd.f32 %v1240, %v1232
  %v1242 = vadd.f32 %v1241, %v1233
  %v1243 = vadd.f32 %v1242, %v1234
  %v1244 = vadd.f32 %v1243, %v1235
  %v1245 = vadd.f32 %v1244, %v1236
  %v1246 = vadd.f32 %v1245, %v1237
  %v1247 = vrot.slane %v1246, 4
  %v1248 = vadd.f32 %v1246, %v1247
  %v1249 = vrot.slane %v1248, 2
  %v1250 = vadd.f32 %v1248, %v1249
  %v1251 = vrot.slane %v1250, 1
  %v1252 = vadd.f32 %v1250, %v1251
  %v1253 = vmul.f32 %v1252, %v155
  %v1254 = vsub.f32 %v1230, %v1253
  %v1255 = vsub.f32 %v1231, %v1253
  %v1256 = vsub.f32 %v1232, %v1253
  %v1257 = vsub.f32 %v1233, %v1253
  %v1258 = vsub.f32 %v1234, %v1253
  %v1259 = vsub.f32 %v1235, %v1253
  %v1260 = vsub.f32 %v1236, %v1253
  %v1261 = vsub.f32 %v1237, %v1253
  %v1262 = vmul.f32 %v1254, %v1254
  %v1263 = vmul.f32 %v1255, %v1255
  %v1264 = vmul.f32 %v1256, %v1256
  %v1265 = vmul.f32 %v1257, %v1257
  %v1266 = vmul.f32 %v1258, %v1258
  %v1267 = vmul.f32 %v1259, %v1259
  %v1268 = vmul.f32 %v1260, %v1260
  %v1269 = vmul.f32 %v1261, %v1261
  %v1270 = vadd.f32 %v1262, %v1263
  %v1271 = vadd.f32 %v1270, %v1264
  %v1272 = vadd.f32 %v1271, %v1265
  %v1273 = vadd.f32 %v1272, %v1266
  %v1274 = vadd.f32 %v1273, %v1267
  %v1275 = vadd.f32 %v1274, %v1268
  %v1276 = vadd.f32 %v1275, %v1269
  %v1277 = vrot.slane %v1276, 4
  %v1278 = vadd.f32 %v1276, %v1277
  %v1279 = vrot.slane %v1278, 2
  %v1280 = vadd.f32 %v1278, %v1279
  %v1281 = vrot.slane %v1280, 1
  %v1282 = vadd.f32 %v1280, %v1281
  %v1283 = vmul.f32 %v1282, %v155
  %v1284 = vadd.f32 %v1283, 1e-05
  %v1285 = vrsqrt.pop %v1284
  %v1286 = vmul.f32 %v1285, %v1284
  %v1287 = vmul.f32 %v1286, %v1285
  %v1288 = vmul.f32 0.5, %v1287
  %v1289 = vsub.f32 1.5, %v1288
  %v1290 = vmul.f32 %v1285, %v1289
  %vm1291 = vweird.f32 %v1284
  %vm1292 = vweird.f32 %v1285
  %vm1293 = vmor %vm1291, %vm1292
  %v1294 = vsel %vm1293, %v1285, %v1290
  %v1295 = vmul.f32 %v1254, %v1294
  %v1296 = vmul.f32 %v1255, %v1294
  %v1297 = vmul.f32 %v1256, %v1294
  %v1298 = vmul.f32 %v1257, %v1294
  %v1299 = vmul.f32 %v1258, %v1294
  %v1300 = vmul.f32 %v1259, %v1294
  %v1301 = vmul.f32 %v1260, %v1294
  %v1302 = vmul.f32 %v1261, %v1294
  %v1304 = vperm.slane %v1238, 0
  %v1306 = vmul.f32 %v1295, %v1304
  %v1307 = vmul.f32 %v1296, %v1304
  %v1308 = vmul.f32 %v1297, %v1304
  %v1309 = vmul.f32 %v1298, %v1304
  %v1310 = vmul.f32 %v1299, %v1304
  %v1311 = vmul.f32 %v1300, %v1304
  %v1312 = vmul.f32 %v1301, %v1304
  %v1313 = vmul.f32 %v1302, %v1304
  %v1315 = vperm.slane %v1239, 0
  %v1317 = vadd.f32 %v1306, %v1315
  %v1318 = vadd.f32 %v1307, %v1315
  %v1319 = vadd.f32 %v1308, %v1315
  %v1320 = vadd.f32 %v1309, %v1315
  %v1321 = vadd.f32 %v1310, %v1315
  %v1322 = vadd.f32 %v1311, %v1315
  %v1323 = vadd.f32 %v1312, %v1315
  %v1324 = vadd.f32 %v1313, %v1315
  %1325 = vst [vmem:[%s11] sm:$0xff] %v1317
  %1326 = vst [vmem:[%s11 + $0x8] sm:$0xff] %v1318
  %1327 = vst [vmem:[%s11 + $0x10] sm:$0xff] %v1319
  %1328 = vst [vmem:[%s11 + $0x18] sm:$0xff] %v1320
  %1329 = vst [vmem:[%s11 + $0x20] sm:$0xff] %v1321
  %1330 = vst [vmem:[%s11 + $0x28] sm:$0xff] %v1322
  %1331 = vst [vmem:[%s11 + $0x30] sm:$0xff] %v1323
  %1332 = vst [vmem:[%s11 + $0x38] sm:$0xff] %v1324
  // Predicated region
  $region46: #{_lambda_.2} parent=0 // pred_check
    _
  $region47: #{_lambda_.2} parent=0 // pred_check_branch
    %1334 = sbr.rel (0) target = $region49
  $region48: #{_lambda_.2} parent=0 // pred_region
    _
  $region49: #{_lambda_.2} parent=0 // pred_fallthru
    _
  // Predicated region
  $region50: #{_lambda_.2} parent=0 // pred_check
    _
  $region51: #{_lambda_.2} parent=0 // pred_check_branch
    %1336 = sbr.rel (0) target = $region53
  $region52: #{_lambda_.2} parent=0 // pred_region
    _
  $region53: #{_lambda_.2} parent=0 // pred_fallthru
    _

// kernel: _lambda_.3
$region0: #{_lambda_.3}
  #allocation0 [shape = 'u32[]', space=smem, size = 0x4, offset = 0x4, fixed_abs, tag = 'smem constant byte address 0x4 - core index']
  #allocation1 [shape = 'u32[72,128]{1,0:T(1,128)}', space=vmem, size = 0x9000, scoped, tag = 'internal scratch']
  #allocation2 [shape = 'f32[64,128]{1,0:T(8,128)}', space=vmem, size = 0x8000, scoped, tag = 'scratch operand']
  %s0 = inlined_call_operand.vmem [shape: f32[64,128], index: 0, kind: input, shape index: {}]
  %s1 = inlined_call_operand.vmem [shape: f32[64,128], index: 1, kind: input, shape index: {}]
  %s2 = inlined_call_operand.vmem [shape: f32[64,128], index: 2, kind: input, shape index: {}]
  %s3 = inlined_call_operand.vmem [shape: f32[1,128], index: 3, kind: input, shape index: {}, may-alias: {3,9}]
  %s4 = inlined_call_operand.vmem [shape: f32[1,128], index: 4, kind: input, shape index: {}, may-alias: {4,10}]
  %s5 = inlined_call_operand.vmem [shape: bf16[128,512], index: 5, kind: input, shape index: {}]
  %s6 = inlined_call_operand.vmem [shape: f32[1,512], index: 6, kind: input, shape index: {}]
  %s7 = inlined_call_operand.vmem [shape: bf16[512,128], index: 7, kind: input, shape index: {}]
  %s8 = inlined_call_operand.vmem [shape: f32[1,128], index: 8, kind: input, shape index: {}]
  %s9 = inlined_call_operand.vmem [shape: f32[1,128], index: 9, kind: input, shape index: {}, may-alias: {3,9}]
  %s10 = inlined_call_operand.vmem [shape: f32[1,128], index: 10, kind: input, shape index: {}, may-alias: {4,10}]
  %s11 = inlined_call_operand.hbm [shape: f32[64,128], index: 11, kind: output, shape index: {}]
  %s12 = sld [smem:[#allocation0]]
  $region54: #{_lambda_.3} parent=0
    _
  %s14 = ssub.s32 1, %s12
  %s15 = scalar_select 0, %s14, %s12
  $region1: #{_lambda_.3} parent=0
    #allocation3 [shape = 'u8[32768]{0}', space=vmem, size = 0x8000, scoped, tag = 'output window, operand 0, single buffered']
    #allocation4 [shape = 's32[1]{0}', space=sflag, size = 0x4, scoped, tag = 'scoped memory for _lambda_.3']
    %16 = vsyncpa [#allocation4], 0
    // Predicated region
    $region2: #{_lambda_.3} parent=1 // pred_check
      _
    $region3: #{_lambda_.3} parent=1 // pred_check_branch
      %18 = sbr.rel (0) target = $region5
    $region4: #{_lambda_.3} parent=1 // pred_region
      _
    $region5: #{_lambda_.3} parent=1 // pred_fallthru
      _
    // Predicated region
    $region6: #{_lambda_.3} parent=1 // pred_check
      _
    $region7: #{_lambda_.3} parent=1 // pred_check_branch
      %20 = sbr.rel (0) target = $region9
    $region8: #{_lambda_.3} parent=1 // pred_region
      _
    $region9: #{_lambda_.3} parent=1 // pred_fallthru
      _
    // Predicated region
    $region10: #{_lambda_.3} parent=1 // pred_check
      _
    $region11: #{_lambda_.3} parent=1 // pred_check_branch
      %22 = sbr.rel (0) target = $region13
    $region12: #{_lambda_.3} parent=1 // pred_region
      _
    $region13: #{_lambda_.3} parent=1 // pred_fallthru
      _
    // Predicated region
    $region14: #{_lambda_.3} parent=1 // pred_check
      _
    $region15: #{_lambda_.3} parent=1 // pred_check_branch
      %24 = sbr.rel (0) target = $region17
    $region16: #{_lambda_.3} parent=1 // pred_region
      _
    $region17: #{_lambda_.3} parent=1 // pred_fallthru
      _
    // Predicated region
    $region18: #{_lambda_.3} parent=1 // pred_check
      _
    $region19: #{_lambda_.3} parent=1 // pred_check_branch
      %26 = sbr.rel (0) target = $region21
    $region20: #{_lambda_.3} parent=1 // pred_region
      _
    $region21: #{_lambda_.3} parent=1 // pred_fallthru
      _
    // Predicated region
    $region22: #{_lambda_.3} parent=1 // pred_check
      _
    $region23: #{_lambda_.3} parent=1 // pred_check_branch
      %28 = sbr.rel (0) target = $region25
    $region24: #{_lambda_.3} parent=1 // pred_region
      _
    $region25: #{_lambda_.3} parent=1 // pred_fallthru
      _
    // Predicated region
    $region26: #{_lambda_.3} parent=1 // pred_check
      _
    $region27: #{_lambda_.3} parent=1 // pred_check_branch
      %30 = sbr.rel (0) target = $region29
    $region28: #{_lambda_.3} parent=1 // pred_region
      _
    $region29: #{_lambda_.3} parent=1 // pred_fallthru
      _
    // Predicated region
    $region30: #{_lambda_.3} parent=1 // pred_check
      _
    $region31: #{_lambda_.3} parent=1 // pred_check_branch
      %32 = sbr.rel (0) target = $region33
    $region32: #{_lambda_.3} parent=1 // pred_region
      _
    $region33: #{_lambda_.3} parent=1 // pred_fallthru
      _
    // Predicated region
    $region34: #{_lambda_.3} parent=1 // pred_check
      _
    $region35: #{_lambda_.3} parent=1 // pred_check_branch
      %34 = sbr.rel (0) target = $region37
    $region36: #{_lambda_.3} parent=1 // pred_region
      _
    $region37: #{_lambda_.3} parent=1 // pred_fallthru
      _
    // Predicated region
    $region38: #{_lambda_.3} parent=1 // pred_check
      _
    $region39: #{_lambda_.3} parent=1 // pred_check_branch
      %36 = sbr.rel (0) target = $region41
    $region40: #{_lambda_.3} parent=1 // pred_region
      _
    $region41: #{_lambda_.3} parent=1 // pred_fallthru
      _
    // Predicated region
    $region42: #{_lambda_.3} parent=1 // pred_check
      _
    $region43: #{_lambda_.3} parent=1 // pred_check_branch
      %38 = sbr.rel (0) target = $region45
    $region44: #{_lambda_.3} parent=1 // pred_region
      _
    $region45: #{_lambda_.3} parent=1 // pred_fallthru
      _
    %v39 = vld [vmem:[%s1] sm:$0xff]
    %v40 = vld [vmem:[%s1 + $0x8] sm:$0xff]
    %v41 = vld [vmem:[%s1 + $0x10] sm:$0xff]
    %v42 = vld [vmem:[%s1 + $0x18] sm:$0xff]
    %v43 = vld [vmem:[%s1 + $0x20] sm:$0xff]
    %v44 = vld [vmem:[%s1 + $0x28] sm:$0xff]
    %v45 = vld [vmem:[%s1 + $0x30] sm:$0xff]
    %v46 = vld [vmem:[%s1 + $0x38] sm:$0xff]
    %v47 = vld [vmem:[%s2] sm:$0xff]
    %v48 = vld [vmem:[%s2 + $0x8] sm:$0xff]
    %v49 = vld [vmem:[%s2 + $0x10] sm:$0xff]
    %v50 = vld [vmem:[%s2 + $0x18] sm:$0xff]
    %v51 = vld [vmem:[%s2 + $0x20] sm:$0xff]
    %v52 = vld [vmem:[%s2 + $0x28] sm:$0xff]
    %v53 = vld [vmem:[%s2 + $0x30] sm:$0xff]
    %v54 = vld [vmem:[%s2 + $0x38] sm:$0xff]
    %v55 = vmul.f32 %v39, %v47
    %v56 = vmul.f32 %v40, %v48
    %v57 = vmul.f32 %v41, %v49
    %v58 = vmul.f32 %v42, %v50
    %v59 = vmul.f32 %v43, %v51
    %v60 = vmul.f32 %v44, %v52
    %v61 = vmul.f32 %v45, %v53
    %v62 = vmul.f32 %v46, %v54
    %v63 = vsub.f32 %v55, %v59
    %v64 = vsub.f32 %v56, %v60
    %v65 = vsub.f32 %v57, %v61
    %v66 = vsub.f32 %v58, %v62
    %v67 = vmul.f32 %v63, 0.25
    %v68 = vmul.f32 %v64, 0.25
    %v69 = vmul.f32 %v65, 0.25
    %v70 = vmul.f32 %v66, 0.25
    %v71 = vmul.f32 %v39, %v51
    %v72 = vmul.f32 %v40, %v52
    %v73 = vmul.f32 %v41, %v53
    %v74 = vmul.f32 %v42, %v54
    %v75 = vmul.f32 %v43, %v47
    %v76 = vmul.f32 %v44, %v48
    %v77 = vmul.f32 %v45, %v49
    %v78 = vmul.f32 %v46, %v50
    %v79 = vsub.f32 %v71, %v75
    %v80 = vsub.f32 %v72, %v76
    %v81 = vsub.f32 %v73, %v77
    %v82 = vsub.f32 %v74, %v78
    %v83 = vmul.f32 %v79, 0.25
    %v84 = vmul.f32 %v80, 0.25
    %v85 = vmul.f32 %v81, 0.25
    %v86 = vmul.f32 %v82, 0.25
    %v87 = vld [vmem:[%s0] sm:$0xff]
    %v88 = vld [vmem:[%s0 + $0x8] sm:$0xff]
    %v89 = vld [vmem:[%s0 + $0x10] sm:$0xff]
    %v90 = vld [vmem:[%s0 + $0x18] sm:$0xff]
    %v91 = vsub.f32 %v67, %v83
    %v92 = vsub.f32 %v68, %v84
    %v93 = vsub.f32 %v69, %v85
    %v94 = vsub.f32 %v70, %v86
    %v95 = vmul.f32 %v91, %v39
    %v96 = vmul.f32 %v92, %v40
    %v97 = vmul.f32 %v93, %v41
    %v98 = vmul.f32 %v94, %v42
    %v99 = vadd.f32 %v87, %v95
    %v100 = vadd.f32 %v88, %v96
    %v101 = vadd.f32 %v89, %v97
    %v102 = vadd.f32 %v90, %v98
    %103 = vst [vmem:[#allocation2] sm:$0xff] %v99
    %104 = vst [vmem:[#allocation2 + $0x8] sm:$0xff] %v100
    %105 = vst [vmem:[#allocation2 + $0x10] sm:$0xff] %v101
    %106 = vst [vmem:[#allocation2 + $0x18] sm:$0xff] %v102
    %v107 = vld [vmem:[%s0 + $0x20] sm:$0xff]
    %v108 = vld [vmem:[%s0 + $0x28] sm:$0xff]
    %v109 = vld [vmem:[%s0 + $0x30] sm:$0xff]
    %v110 = vld [vmem:[%s0 + $0x38] sm:$0xff]
    %v111 = vadd.f32 %v67, %v83
    %v112 = vadd.f32 %v68, %v84
    %v113 = vadd.f32 %v69, %v85
    %v114 = vadd.f32 %v70, %v86
    %v115 = vmul.f32 %v111, %v39
    %v116 = vmul.f32 %v112, %v40
    %v117 = vmul.f32 %v113, %v41
    %v118 = vmul.f32 %v114, %v42
    %v119 = vadd.f32 %v107, %v115
    %v120 = vadd.f32 %v108, %v116
    %v121 = vadd.f32 %v109, %v117
    %v122 = vadd.f32 %v110, %v118
    %123 = vst [vmem:[#allocation2 + $0x20] sm:$0xff] %v119
    %124 = vst [vmem:[#allocation2 + $0x28] sm:$0xff] %v120
    %125 = vst [vmem:[#allocation2 + $0x30] sm:$0xff] %v121
    %126 = vst [vmem:[#allocation2 + $0x38] sm:$0xff] %v122
    %v127 = vld [vmem:[#allocation2] sm:$0xff]
    %v128 = vld [vmem:[#allocation2 + $0x8] sm:$0xff]
    %v129 = vld [vmem:[#allocation2 + $0x10] sm:$0xff]
    %v130 = vld [vmem:[#allocation2 + $0x18] sm:$0xff]
    %v131 = vld [vmem:[#allocation2 + $0x20] sm:$0xff]
    %v132 = vld [vmem:[#allocation2 + $0x28] sm:$0xff]
    %v133 = vld [vmem:[#allocation2 + $0x30] sm:$0xff]
    %v134 = vld [vmem:[#allocation2 + $0x38] sm:$0xff]
    %v135 = vld [vmem:[%s3] sm:$0x1]
    %v136 = vld [vmem:[%s4] sm:$0x1]
    %v137 = vadd.f32 %v127, %v128
    %v138 = vadd.f32 %v137, %v129
    %v139 = vadd.f32 %v138, %v130
    %v140 = vadd.f32 %v139, %v131
    %v141 = vadd.f32 %v140, %v132
    %v142 = vadd.f32 %v141, %v133
    %v143 = vadd.f32 %v142, %v134
    %v144 = vrot.slane %v143, 4
    %v145 = vadd.f32 %v143, %v144
    %v146 = vrot.slane %v145, 2
    %v147 = vadd.f32 %v145, %v146
    %v148 = vrot.slane %v147, 1
    %v149 = vadd.f32 %v147, %v148
    %v150 = vrcp.pop 64.0
    %v151 = vmul.f32 64.0, %v150
    %v152 = vsub.f32 1.0, %v151
    %v153 = vmul.f32 %v150, %v152
    %v154 = vadd.f32 %v150, %v153
    %vm155 = vweird.f32 %v150
    %v156 = vsel %vm155, %v150, %v154
    %v157 = vmul.f32 %v149, %v156
    %v158 = vsub.f32 %v127, %v157
    %v159 = vsub.f32 %v128, %v157
    %v160 = vsub.f32 %v129, %v157
    %v161 = vsub.f32 %v130, %v157
    %v162 = vsub.f32 %v131, %v157
    %v163 = vsub.f32 %v132, %v157
    %v164 = vsub.f32 %v133, %v157
    %v165 = vsub.f32 %v134, %v157
    %v166 = vmul.f32 %v158, %v158
    %v167 = vmul.f32 %v159, %v159
    %v168 = vmul.f32 %v160, %v160
    %v169 = vmul.f32 %v161, %v161
    %v170 = vmul.f32 %v162, %v162
    %v171 = vmul.f32 %v163, %v163
    %v172 = vmul.f32 %v164, %v164
    %v173 = vmul.f32 %v165, %v165
    %v174 = vadd.f32 %v166, %v167
    %v175 = vadd.f32 %v174, %v168
    %v176 = vadd.f32 %v175, %v169
    %v177 = vadd.f32 %v176, %v170
    %v178 = vadd.f32 %v177, %v171
    %v179 = vadd.f32 %v178, %v172
    %v180 = vadd.f32 %v179, %v173
    %v181 = vrot.slane %v180, 4
    %v182 = vadd.f32 %v180, %v181
    %v183 = vrot.slane %v182, 2
    %v184 = vadd.f32 %v182, %v183
    %v185 = vrot.slane %v184, 1
    %v186 = vadd.f32 %v184, %v185
    %v187 = vmul.f32 %v186, %v156
    %v188 = vadd.f32 %v187, 1e-05
    %v189 = vrsqrt.pop %v188
    %v190 = vmul.f32 %v189, %v188
    %v191 = vmul.f32 %v190, %v189
    %v192 = vmul.f32 0.5, %v191
    %v193 = vsub.f32 1.5, %v192
    %v194 = vmul.f32 %v189, %v193
    %vm195 = vweird.f32 %v188
    %vm196 = vweird.f32 %v189
    %vm197 = vmor %vm195, %vm196
    %v198 = vsel %vm197, %v189, %v194
    %v199 = vmul.f32 %v158, %v198
    %v200 = vmul.f32 %v159, %v198
    %v201 = vmul.f32 %v160, %v198
    %v202 = vmul.f32 %v161, %v198
    %v203 = vmul.f32 %v162, %v198
    %v204 = vmul.f32 %v163, %v198
    %v205 = vmul.f32 %v164, %v198
    %v206 = vmul.f32 %v165, %v198
    %v208 = vperm.slane %v135, 0
    %v210 = vmul.f32 %v199, %v208
    %v211 = vmul.f32 %v200, %v208
    %v212 = vmul.f32 %v201, %v208
    %v213 = vmul.f32 %v202, %v208
    %v214 = vmul.f32 %v203, %v208
    %v215 = vmul.f32 %v204, %v208
    %v216 = vmul.f32 %v205, %v208
    %v217 = vmul.f32 %v206, %v208
    %v219 = vperm.slane %v136, 0
    %v221 = vadd.f32 %v210, %v219
    %v222 = vadd.f32 %v211, %v219
    %v223 = vadd.f32 %v212, %v219
    %v224 = vadd.f32 %v213, %v219
    %v225 = vadd.f32 %v214, %v219
    %v226 = vadd.f32 %v215, %v219
    %v227 = vadd.f32 %v216, %v219
    %v228 = vadd.f32 %v217, %v219
    %v229 = vpack.c.bf16 %v222, %v221
    %v230 = vpack.c.bf16 %v224, %v223
    %v231 = vpack.c.bf16 %v226, %v225
    %v232 = vpack.c.bf16 %v228, %v227
    %v233 = vld [vmem:[%s5] sm:$0xff]
    %v234 = vld [vmem:[%s5 + $0x8] sm:$0xff]
    %v235 = vld [vmem:[%s5 + $0x10] sm:$0xff]
    %v236 = vld [vmem:[%s5 + $0x18] sm:$0xff]
    %v237 = vld [vmem:[%s5 + $0x20] sm:$0xff]
    %v238 = vld [vmem:[%s5 + $0x28] sm:$0xff]
    %v239 = vld [vmem:[%s5 + $0x30] sm:$0xff]
    %v240 = vld [vmem:[%s5 + $0x38] sm:$0xff]
    %v241 = vld [vmem:[%s5 + $0x40] sm:$0xff]
    %v242 = vld [vmem:[%s5 + $0x48] sm:$0xff]
    %v243 = vld [vmem:[%s5 + $0x50] sm:$0xff]
    %v244 = vld [vmem:[%s5 + $0x58] sm:$0xff]
    %v245 = vld [vmem:[%s5 + $0x60] sm:$0xff]
    %v246 = vld [vmem:[%s5 + $0x68] sm:$0xff]
    %v247 = vld [vmem:[%s5 + $0x70] sm:$0xff]
    %v248 = vld [vmem:[%s5 + $0x78] sm:$0xff]
    %v249 = vld [vmem:[%s5 + $0x80] sm:$0xff]
    %v250 = vld [vmem:[%s5 + $0x88] sm:$0xff]
    %v251 = vld [vmem:[%s5 + $0x90] sm:$0xff]
    %v252 = vld [vmem:[%s5 + $0x98] sm:$0xff]
    %v253 = vld [vmem:[%s5 + $0xa0] sm:$0xff]
    %v254 = vld [vmem:[%s5 + $0xa8] sm:$0xff]
    %v255 = vld [vmem:[%s5 + $0xb0] sm:$0xff]
    %v256 = vld [vmem:[%s5 + $0xb8] sm:$0xff]
    %v257 = vld [vmem:[%s5 + $0xc0] sm:$0xff]
    %v258 = vld [vmem:[%s5 + $0xc8] sm:$0xff]
    %v259 = vld [vmem:[%s5 + $0xd0] sm:$0xff]
    %v260 = vld [vmem:[%s5 + $0xd8] sm:$0xff]
    %v261 = vld [vmem:[%s5 + $0xe0] sm:$0xff]
    %v262 = vld [vmem:[%s5 + $0xe8] sm:$0xff]
    %v263 = vld [vmem:[%s5 + $0xf0] sm:$0xff]
    %v264 = vld [vmem:[%s5 + $0xf8] sm:$0xff]
    %v265 = vld [vmem:[%s6] sm:$0xf]
    %v267 = vperm.slane %v265, 0
    %v268 = vperm.slane %v265, 1
    %v269 = vperm.slane %v265, 2
    %v270 = vperm.slane %v265, 3
    %v307 = vunpack.c.l.b16 %v233
    %v308 = vunpack.c.h.b16 %v233
    %v309 = vunpack.c.l.b16 %v234
    %v310 = vunpack.c.h.b16 %v234
    %v311 = vunpack.c.l.b16 %v235
    %v312 = vunpack.c.h.b16 %v235
    %v313 = vunpack.c.l.b16 %v236
    %v314 = vunpack.c.h.b16 %v236
    %v315 = vunpack.c.l.b16 %v237
    %v316 = vunpack.c.h.b16 %v237
    %v317 = vunpack.c.l.b16 %v238
    %v318 = vunpack.c.h.b16 %v238
    %v319 = vunpack.c.l.b16 %v239
    %v320 = vunpack.c.h.b16 %v239
    %v321 = vunpack.c.l.b16 %v240
    %v322 = vunpack.c.h.b16 %v240
    %v323 = vunpack.c.l.b16 %v241
    %v324 = vunpack.c.h.b16 %v241
    %v325 = vunpack.c.l.b16 %v242
    %v326 = vunpack.c.h.b16 %v242
    %v327 = vunpack.c.l.b16 %v243
    %v328 = vunpack.c.h.b16 %v243
    %v329 = vunpack.c.l.b16 %v244
    %v330 = vunpack.c.h.b16 %v244
    %v331 = vunpack.c.l.b16 %v245
    %v332 = vunpack.c.h.b16 %v245
    %v333 = vunpack.c.l.b16 %v246
    %v334 = vunpack.c.h.b16 %v246
    %v335 = vunpack.c.l.b16 %v247
    %v336 = vunpack.c.h.b16 %v247
    %v337 = vunpack.c.l.b16 %v248
    %v338 = vunpack.c.h.b16 %v248
    %v339 = vunpack.c.l.b16 %v249
    %v340 = vunpack.c.h.b16 %v249
    %v341 = vunpack.c.l.b16 %v250
    %v342 = vunpack.c.h.b16 %v250
    %v343 = vunpack.c.l.b16 %v251
    %v344 = vunpack.c.h.b16 %v251
    %v345 = vunpack.c.l.b16 %v252
    %v346 = vunpack.c.h.b16 %v252
    %v347 = vunpack.c.l.b16 %v253
    %v348 = vunpack.c.h.b16 %v253
    %v349 = vunpack.c.l.b16 %v254
    %v350 = vunpack.c.h.b16 %v254
    %v351 = vunpack.c.l.b16 %v255
    %v352 = vunpack.c.h.b16 %v255
    %v353 = vunpack.c.l.b16 %v256
    %v354 = vunpack.c.h.b16 %v256
    %v355 = vunpack.c.l.b16 %v257
    %v356 = vunpack.c.h.b16 %v257
    %v357 = vunpack.c.l.b16 %v258
    %v358 = vunpack.c.h.b16 %v258
    %v359 = vunpack.c.l.b16 %v259
    %v360 = vunpack.c.h.b16 %v259
    %v361 = vunpack.c.l.b16 %v260
    %v362 = vunpack.c.h.b16 %v260
    %v363 = vunpack.c.l.b16 %v261
    %v364 = vunpack.c.h.b16 %v261
    %v365 = vunpack.c.l.b16 %v262
    %v366 = vunpack.c.h.b16 %v262
    %v367 = vunpack.c.l.b16 %v263
    %v368 = vunpack.c.h.b16 %v263
    %v369 = vunpack.c.l.b16 %v264
    %v370 = vunpack.c.h.b16 %v264
    %v371 = vpack.c.b16 %v311, %v307
    %v372 = vpack.c.b16 %v312, %v308
    %v373 = vpack.c.b16 %v313, %v309
    %v374 = vpack.c.b16 %v314, %v310
    %v375 = vpack.c.b16 %v319, %v315
    %v376 = vpack.c.b16 %v320, %v316
    %v377 = vpack.c.b16 %v321, %v317
    %v378 = vpack.c.b16 %v322, %v318
    %v379 = vpack.c.b16 %v327, %v323
    %v380 = vpack.c.b16 %v328, %v324
    %v381 = vpack.c.b16 %v329, %v325
    %v382 = vpack.c.b16 %v330, %v326
    %v383 = vpack.c.b16 %v335, %v331
    %v384 = vpack.c.b16 %v336, %v332
    %v385 = vpack.c.b16 %v337, %v333
    %v386 = vpack.c.b16 %v338, %v334
    %v387 = vpack.c.b16 %v343, %v339
    %v388 = vpack.c.b16 %v344, %v340
    %v389 = vpack.c.b16 %v345, %v341
    %v390 = vpack.c.b16 %v346, %v342
    %v391 = vpack.c.b16 %v351, %v347
    %v392 = vpack.c.b16 %v352, %v348
    %v393 = vpack.c.b16 %v353, %v349
    %v394 = vpack.c.b16 %v354, %v350
    %v395 = vpack.c.b16 %v359, %v355
    %v396 = vpack.c.b16 %v360, %v356
    %v397 = vpack.c.b16 %v361, %v357
    %v398 = vpack.c.b16 %v362, %v358
    %v399 = vpack.c.b16 %v367, %v363
    %v400 = vpack.c.b16 %v368, %v364
    %v401 = vpack.c.b16 %v369, %v365
    %v402 = vpack.c.b16 %v370, %v366
    %435 = vmatpush.bf16.msra.mxu0 %v399
    %436 = vmatpush.bf16.msra.mxu0 %v395
    %437 = vmatpush.bf16.msra.mxu0 %v391
    %438 = vmatpush.bf16.msra.mxu0 %v387
    %439 = vmatpush.bf16.msra.mxu0 %v383
    %440 = vmatpush.bf16.msra.mxu0 %v379
    %441 = vmatpush.bf16.msra.mxu0 %v375
    %442 = vmatpush.bf16.msra.mxu0 %v371
    %443 = vmatmul.bf16.gmra.mxu0 %v229
    %v444 = vpop.f32.mrf.mxu0
    %v445 = vadd.f32 %v267, %v444
    %v446 = vpop.f32.mrf.mxu0
    %v447 = vadd.f32 %v267, %v446
    %448 = vmatmul.bf16.gmra.mxu0 %v230
    %v449 = vpop.f32.mrf.mxu0
    %v450 = vadd.f32 %v267, %v449
    %v451 = vpop.f32.mrf.mxu0
    %v452 = vadd.f32 %v267, %v451
    %453 = vmatmul.bf16.gmra.mxu0 %v231
    %v454 = vpop.f32.mrf.mxu0
    %v455 = vadd.f32 %v267, %v454
    %v456 = vpop.f32.mrf.mxu0
    %v457 = vadd.f32 %v267, %v456
    %458 = vmatmul.bf16.gmra.mxu0 %v232
    %v459 = vpop.f32.mrf.mxu0
    %v460 = vadd.f32 %v267, %v459
    %v461 = vpop.f32.mrf.mxu0
    %v462 = vadd.f32 %v267, %v461
    %463 = vdwg.mxu0
    %464 = vmatpush.bf16.msra.mxu0 %v400
    %465 = vmatpush.bf16.msra.mxu0 %v396
    %466 = vmatpush.bf16.msra.mxu0 %v392
    %467 = vmatpush.bf16.msra.mxu0 %v388
    %468 = vmatpush.bf16.msra.mxu0 %v384
    %469 = vmatpush.bf16.msra.mxu0 %v380
    %470 = vmatpush.bf16.msra.mxu0 %v376
    %471 = vmatpush.bf16.msra.mxu0 %v372
    %472 = vmatmul.bf16.gmra.mxu0 %v229
    %v473 = vpop.f32.mrf.mxu0
    %v474 = vadd.f32 %v268, %v473
    %v475 = vpop.f32.mrf.mxu0
    %v476 = vadd.f32 %v268, %v475
    %477 = vmatmul.bf16.gmra.mxu0 %v230
    %v478 = vpop.f32.mrf.mxu0
    %v479 = vadd.f32 %v268, %v478
    %v480 = vpop.f32.mrf.mxu0
    %v481 = vadd.f32 %v268, %v480
    %482 = vmatmul.bf16.gmra.mxu0 %v231
    %v483 = vpop.f32.mrf.mxu0
    %v484 = vadd.f32 %v268, %v483
    %v485 = vpop.f32.mrf.mxu0
    %v486 = vadd.f32 %v268, %v485
    %487 = vmatmul.bf16.gmra.mxu0 %v232
    %v488 = vpop.f32.mrf.mxu0
    %v489 = vadd.f32 %v268, %v488
    %v490 = vpop.f32.mrf.mxu0
    %v491 = vadd.f32 %v268, %v490
    %492 = vdwg.mxu0
    %493 = vmatpush.bf16.msra.mxu0 %v401
    %494 = vmatpush.bf16.msra.mxu0 %v397
    %495 = vmatpush.bf16.msra.mxu0 %v393
    %496 = vmatpush.bf16.msra.mxu0 %v389
    %497 = vmatpush.bf16.msra.mxu0 %v385
    %498 = vmatpush.bf16.msra.mxu0 %v381
    %499 = vmatpush.bf16.msra.mxu0 %v377
    %500 = vmatpush.bf16.msra.mxu0 %v373
    %501 = vmatmul.bf16.gmra.mxu0 %v229
    %v502 = vpop.f32.mrf.mxu0
    %v503 = vadd.f32 %v269, %v502
    %v504 = vpop.f32.mrf.mxu0
    %v505 = vadd.f32 %v269, %v504
    %506 = vmatmul.bf16.gmra.mxu0 %v230
    %v507 = vpop.f32.mrf.mxu0
    %v508 = vadd.f32 %v269, %v507
    %v509 = vpop.f32.mrf.mxu0
    %v510 = vadd.f32 %v269, %v509
    %511 = vmatmul.bf16.gmra.mxu0 %v231
    %v512 = vpop.f32.mrf.mxu0
    %v513 = vadd.f32 %v269, %v512
    %v514 = vpop.f32.mrf.mxu0
    %v515 = vadd.f32 %v269, %v514
    %516 = vmatmul.bf16.gmra.mxu0 %v232
    %v517 = vpop.f32.mrf.mxu0
    %v518 = vadd.f32 %v269, %v517
    %v519 = vpop.f32.mrf.mxu0
    %v520 = vadd.f32 %v269, %v519
    %521 = vdwg.mxu0
    %522 = vmatpush.bf16.msra.mxu0 %v402
    %523 = vmatpush.bf16.msra.mxu0 %v398
    %524 = vmatpush.bf16.msra.mxu0 %v394
    %525 = vmatpush.bf16.msra.mxu0 %v390
    %526 = vmatpush.bf16.msra.mxu0 %v386
    %527 = vmatpush.bf16.msra.mxu0 %v382
    %528 = vmatpush.bf16.msra.mxu0 %v378
    %529 = vmatpush.bf16.msra.mxu0 %v374
    %530 = vmatmul.bf16.gmra.mxu0 %v229
    %v531 = vpop.f32.mrf.mxu0
    %v532 = vadd.f32 %v270, %v531
    %v533 = vpop.f32.mrf.mxu0
    %v534 = vadd.f32 %v270, %v533
    %535 = vmatmul.bf16.gmra.mxu0 %v230
    %v536 = vpop.f32.mrf.mxu0
    %v537 = vadd.f32 %v270, %v536
    %v538 = vpop.f32.mrf.mxu0
    %v539 = vadd.f32 %v270, %v538
    %540 = vmatmul.bf16.gmra.mxu0 %v231
    %v541 = vpop.f32.mrf.mxu0
    %v542 = vadd.f32 %v270, %v541
    %v543 = vpop.f32.mrf.mxu0
    %v544 = vadd.f32 %v270, %v543
    %545 = vmatmul.bf16.gmra.mxu0 %v232
    %v546 = vpop.f32.mrf.mxu0
    %v547 = vadd.f32 %v270, %v546
    %v548 = vpop.f32.mrf.mxu0
    %v549 = vadd.f32 %v270, %v548
    %550 = vdwg.mxu0
    %v551 = vmul.f32 %v445, 0.5
    %v552 = vmul.f32 %v474, 0.5
    %v553 = vmul.f32 %v503, 0.5
    %v554 = vmul.f32 %v532, 0.5
    %v555 = vmul.f32 %v447, 0.5
    %v556 = vmul.f32 %v476, 0.5
    %v557 = vmul.f32 %v505, 0.5
    %v558 = vmul.f32 %v534, 0.5
    %v559 = vmul.f32 %v450, 0.5
    %v560 = vmul.f32 %v479, 0.5
    %v561 = vmul.f32 %v508, 0.5
    %v562 = vmul.f32 %v537, 0.5
    %v563 = vmul.f32 %v452, 0.5
    %v564 = vmul.f32 %v481, 0.5
    %v565 = vmul.f32 %v510, 0.5
    %v566 = vmul.f32 %v539, 0.5
    %v567 = vmul.f32 %v455, 0.5
    %v568 = vmul.f32 %v484, 0.5
    %v569 = vmul.f32 %v513, 0.5
    %v570 = vmul.f32 %v542, 0.5
    %v571 = vmul.f32 %v457, 0.5
    %v572 = vmul.f32 %v486, 0.5
    %v573 = vmul.f32 %v515, 0.5
    %v574 = vmul.f32 %v544, 0.5
    %v575 = vmul.f32 %v460, 0.5
    %v576 = vmul.f32 %v489, 0.5
    %v577 = vmul.f32 %v518, 0.5
    %v578 = vmul.f32 %v547, 0.5
    %v579 = vmul.f32 %v462, 0.5
    %v580 = vmul.f32 %v491, 0.5
    %v581 = vmul.f32 %v520, 0.5
    %v582 = vmul.f32 %v549, 0.5
    %v583 = vmul.f32 %v445, %v445
    %v584 = vmul.f32 %v474, %v474
    %v585 = vmul.f32 %v503, %v503
    %v586 = vmul.f32 %v532, %v532
    %v587 = vmul.f32 %v447, %v447
    %v588 = vmul.f32 %v476, %v476
    %v589 = vmul.f32 %v505, %v505
    %v590 = vmul.f32 %v534, %v534
    %v591 = vmul.f32 %v450, %v450
    %v592 = vmul.f32 %v479, %v479
    %v593 = vmul.f32 %v508, %v508
    %v594 = vmul.f32 %v537, %v537
    %v595 = vmul.f32 %v452, %v452
    %v596 = vmul.f32 %v481, %v481
    %v597 = vmul.f32 %v510, %v510
    %v598 = vmul.f32 %v539, %v539
    %v599 = vmul.f32 %v455, %v455
    %v600 = vmul.f32 %v484, %v484
    %v601 = vmul.f32 %v513, %v513
    %v602 = vmul.f32 %v542, %v542
    %v603 = vmul.f32 %v457, %v457
    %v604 = vmul.f32 %v486, %v486
    %v605 = vmul.f32 %v515, %v515
    %v606 = vmul.f32 %v544, %v544
    %v607 = vmul.f32 %v460, %v460
    %v608 = vmul.f32 %v489, %v489
    %v609 = vmul.f32 %v518, %v518
    %v610 = vmul.f32 %v547, %v547
    %v611 = vmul.f32 %v462, %v462
    %v612 = vmul.f32 %v491, %v491
    %v613 = vmul.f32 %v520, %v520
    %v614 = vmul.f32 %v549, %v549
    %v615 = vmul.f32 %v583, %v445
    %v616 = vmul.f32 %v584, %v474
    %v617 = vmul.f32 %v585, %v503
    %v618 = vmul.f32 %v586, %v532
    %v619 = vmul.f32 %v587, %v447
    %v620 = vmul.f32 %v588, %v476
    %v621 = vmul.f32 %v589, %v505
    %v622 = vmul.f32 %v590, %v534
    %v623 = vmul.f32 %v591, %v450
    %v624 = vmul.f32 %v592, %v479
    %v625 = vmul.f32 %v593, %v508
    %v626 = vmul.f32 %v594, %v537
    %v627 = vmul.f32 %v595, %v452
    %v628 = vmul.f32 %v596, %v481
    %v629 = vmul.f32 %v597, %v510
    %v630 = vmul.f32 %v598, %v539
    %v631 = vmul.f32 %v599, %v455
    %v632 = vmul.f32 %v600, %v484
    %v633 = vmul.f32 %v601, %v513
    %v634 = vmul.f32 %v602, %v542
    %v635 = vmul.f32 %v603, %v457
    %v636 = vmul.f32 %v604, %v486
    %v637 = vmul.f32 %v605, %v515
    %v638 = vmul.f32 %v606, %v544
    %v639 = vmul.f32 %v607, %v460
    %v640 = vmul.f32 %v608, %v489
    %v641 = vmul.f32 %v609, %v518
    %v642 = vmul.f32 %v610, %v547
    %v643 = vmul.f32 %v611, %v462
    %v644 = vmul.f32 %v612, %v491
    %v645 = vmul.f32 %v613, %v520
    %v646 = vmul.f32 %v614, %v549
    %v647 = vmul.f32 %v615, 0.044715
    %v648 = vmul.f32 %v616, 0.044715
    %v649 = vmul.f32 %v617, 0.044715
    %v650 = vmul.f32 %v618, 0.044715
    %v651 = vmul.f32 %v619, 0.044715
    %v652 = vmul.f32 %v620, 0.044715
    %v653 = vmul.f32 %v621, 0.044715
    %v654 = vmul.f32 %v622, 0.044715
    %v655 = vmul.f32 %v623, 0.044715
    %v656 = vmul.f32 %v624, 0.044715
    %v657 = vmul.f32 %v625, 0.044715
    %v658 = vmul.f32 %v626, 0.044715
    %v659 = vmul.f32 %v627, 0.044715
    %v660 = vmul.f32 %v628, 0.044715
    %v661 = vmul.f32 %v629, 0.044715
    %v662 = vmul.f32 %v630, 0.044715
    %v663 = vmul.f32 %v631, 0.044715
    %v664 = vmul.f32 %v632, 0.044715
    %v665 = vmul.f32 %v633, 0.044715
    %v666 = vmul.f32 %v634, 0.044715
    %v667 = vmul.f32 %v635, 0.044715
    %v668 = vmul.f32 %v636, 0.044715
    %v669 = vmul.f32 %v637, 0.044715
    %v670 = vmul.f32 %v638, 0.044715
    %v671 = vmul.f32 %v639, 0.044715
    %v672 = vmul.f32 %v640, 0.044715
    %v673 = vmul.f32 %v641, 0.044715
    %v674 = vmul.f32 %v642, 0.044715
    %v675 = vmul.f32 %v643, 0.044715
    %v676 = vmul.f32 %v644, 0.044715
    %v677 = vmul.f32 %v645, 0.044715
    %v678 = vmul.f32 %v646, 0.044715
    %v679 = vadd.f32 %v445, %v647
    %v680 = vadd.f32 %v474, %v648
    %v681 = vadd.f32 %v503, %v649
    %v682 = vadd.f32 %v532, %v650
    %v683 = vadd.f32 %v447, %v651
    %v684 = vadd.f32 %v476, %v652
    %v685 = vadd.f32 %v505, %v653
    %v686 = vadd.f32 %v534, %v654
    %v687 = vadd.f32 %v450, %v655
    %v688 = vadd.f32 %v479, %v656
    %v689 = vadd.f32 %v508, %v657
    %v690 = vadd.f32 %v537, %v658
    %v691 = vadd.f32 %v452, %v659
    %v692 = vadd.f32 %v481, %v660
    %v693 = vadd.f32 %v510, %v661
    %v694 = vadd.f32 %v539, %v662
    %v695 = vadd.f32 %v455, %v663
    %v696 = vadd.f32 %v484, %v664
    %v697 = vadd.f32 %v513, %v665
    %v698 = vadd.f32 %v542, %v666
    %v699 = vadd.f32 %v457, %v667
    %v700 = vadd.f32 %v486, %v668
    %v701 = vadd.f32 %v515, %v669
    %v702 = vadd.f32 %v544, %v670
    %v703 = vadd.f32 %v460, %v671
    %v704 = vadd.f32 %v489, %v672
    %v705 = vadd.f32 %v518, %v673
    %v706 = vadd.f32 %v547, %v674
    %v707 = vadd.f32 %v462, %v675
    %v708 = vadd.f32 %v491, %v676
    %v709 = vadd.f32 %v520, %v677
    %v710 = vadd.f32 %v549, %v678
    %v711 = vmul.f32 %v679, 0.7978846
    %v712 = vmul.f32 %v680, 0.7978846
    %v713 = vmul.f32 %v681, 0.7978846
    %v714 = vmul.f32 %v682, 0.7978846
    %v715 = vmul.f32 %v683, 0.7978846
    %v716 = vmul.f32 %v684, 0.7978846
    %v717 = vmul.f32 %v685, 0.7978846
    %v718 = vmul.f32 %v686, 0.7978846
    %v719 = vmul.f32 %v687, 0.7978846
    %v720 = vmul.f32 %v688, 0.7978846
    %v721 = vmul.f32 %v689, 0.7978846
    %v722 = vmul.f32 %v690, 0.7978846
    %v723 = vmul.f32 %v691, 0.7978846
    %v724 = vmul.f32 %v692, 0.7978846
    %v725 = vmul.f32 %v693, 0.7978846
    %v726 = vmul.f32 %v694, 0.7978846
    %v727 = vmul.f32 %v695, 0.7978846
    %v728 = vmul.f32 %v696, 0.7978846
    %v729 = vmul.f32 %v697, 0.7978846
    %v730 = vmul.f32 %v698, 0.7978846
    %v731 = vmul.f32 %v699, 0.7978846
    %v732 = vmul.f32 %v700, 0.7978846
    %v733 = vmul.f32 %v701, 0.7978846
    %v734 = vmul.f32 %v702, 0.7978846
    %v735 = vmul.f32 %v703, 0.7978846
    %v736 = vmul.f32 %v704, 0.7978846
    %v737 = vmul.f32 %v705, 0.7978846
    %v738 = vmul.f32 %v706, 0.7978846
    %v739 = vmul.f32 %v707, 0.7978846
    %v740 = vmul.f32 %v708, 0.7978846
    %v741 = vmul.f32 %v709, 0.7978846
    %v742 = vmul.f32 %v710, 0.7978846
    %v743 = vtanh.pop %v711
    %v744 = vtanh.pop %v712
    %v745 = vtanh.pop %v713
    %v746 = vtanh.pop %v714
    %v747 = vtanh.pop %v715
    %v748 = vtanh.pop %v716
    %v749 = vtanh.pop %v717
    %v750 = vtanh.pop %v718
    %v751 = vtanh.pop %v719
    %v752 = vtanh.pop %v720
    %v753 = vtanh.pop %v721
    %v754 = vtanh.pop %v722
    %v755 = vtanh.pop %v723
    %v756 = vtanh.pop %v724
    %v757 = vtanh.pop %v725
    %v758 = vtanh.pop %v726
    %v759 = vtanh.pop %v727
    %v760 = vtanh.pop %v728
    %v761 = vtanh.pop %v729
    %v762 = vtanh.pop %v730
    %v763 = vtanh.pop %v731
    %v764 = vtanh.pop %v732
    %v765 = vtanh.pop %v733
    %v766 = vtanh.pop %v734
    %v767 = vtanh.pop %v735
    %v768 = vtanh.pop %v736
    %v769 = vtanh.pop %v737
    %v770 = vtanh.pop %v738
    %v771 = vtanh.pop %v739
    %v772 = vtanh.pop %v740
    %v773 = vtanh.pop %v741
    %v774 = vtanh.pop %v742
    %v775 = vadd.f32 %v743, 1.0
    %v776 = vadd.f32 %v744, 1.0
    %v777 = vadd.f32 %v745, 1.0
    %v778 = vadd.f32 %v746, 1.0
    %v779 = vadd.f32 %v747, 1.0
    %v780 = vadd.f32 %v748, 1.0
    %v781 = vadd.f32 %v749, 1.0
    %v782 = vadd.f32 %v750, 1.0
    %v783 = vadd.f32 %v751, 1.0
    %v784 = vadd.f32 %v752, 1.0
    %v785 = vadd.f32 %v753, 1.0
    %v786 = vadd.f32 %v754, 1.0
    %v787 = vadd.f32 %v755, 1.0
    %v788 = vadd.f32 %v756, 1.0
    %v789 = vadd.f32 %v757, 1.0
    %v790 = vadd.f32 %v758, 1.0
    %v791 = vadd.f32 %v759, 1.0
    %v792 = vadd.f32 %v760, 1.0
    %v793 = vadd.f32 %v761, 1.0
    %v794 = vadd.f32 %v762, 1.0
    %v795 = vadd.f32 %v763, 1.0
    %v796 = vadd.f32 %v764, 1.0
    %v797 = vadd.f32 %v765, 1.0
    %v798 = vadd.f32 %v766, 1.0
    %v799 = vadd.f32 %v767, 1.0
    %v800 = vadd.f32 %v768, 1.0
    %v801 = vadd.f32 %v769, 1.0
    %v802 = vadd.f32 %v770, 1.0
    %v803 = vadd.f32 %v771, 1.0
    %v804 = vadd.f32 %v772, 1.0
    %v805 = vadd.f32 %v773, 1.0
    %v806 = vadd.f32 %v774, 1.0
    %v807 = vmul.f32 %v551, %v775
    %v808 = vmul.f32 %v552, %v776
    %v809 = vmul.f32 %v553, %v777
    %v810 = vmul.f32 %v554, %v778
    %v811 = vmul.f32 %v555, %v779
    %v812 = vmul.f32 %v556, %v780
    %v813 = vmul.f32 %v557, %v781
    %v814 = vmul.f32 %v558, %v782
    %v815 = vmul.f32 %v559, %v783
    %v816 = vmul.f32 %v560, %v784
    %v817 = vmul.f32 %v561, %v785
    %v818 = vmul.f32 %v562, %v786
    %v819 = vmul.f32 %v563, %v787
    %v820 = vmul.f32 %v564, %v788
    %v821 = vmul.f32 %v565, %v789
    %v822 = vmul.f32 %v566, %v790
    %v823 = vmul.f32 %v567, %v791
    %v824 = vmul.f32 %v568, %v792
    %v825 = vmul.f32 %v569, %v793
    %v826 = vmul.f32 %v570, %v794
    %v827 = vmul.f32 %v571, %v795
    %v828 = vmul.f32 %v572, %v796
    %v829 = vmul.f32 %v573, %v797
    %v830 = vmul.f32 %v574, %v798
    %v831 = vmul.f32 %v575, %v799
    %v832 = vmul.f32 %v576, %v800
    %v833 = vmul.f32 %v577, %v801
    %v834 = vmul.f32 %v578, %v802
    %v835 = vmul.f32 %v579, %v803
    %v836 = vmul.f32 %v580, %v804
    %v837 = vmul.f32 %v581, %v805
    %v838 = vmul.f32 %v582, %v806
    %v839 = vpack.c.bf16 %v811, %v807
    %v840 = vpack.c.bf16 %v812, %v808
    %v841 = vpack.c.bf16 %v813, %v809
    %v842 = vpack.c.bf16 %v814, %v810
    %v843 = vpack.c.bf16 %v819, %v815
    %v844 = vpack.c.bf16 %v820, %v816
    %v845 = vpack.c.bf16 %v821, %v817
    %v846 = vpack.c.bf16 %v822, %v818
    %v847 = vpack.c.bf16 %v827, %v823
    %v848 = vpack.c.bf16 %v828, %v824
    %v849 = vpack.c.bf16 %v829, %v825
    %v850 = vpack.c.bf16 %v830, %v826
    %v851 = vpack.c.bf16 %v835, %v831
    %v852 = vpack.c.bf16 %v836, %v832
    %v853 = vpack.c.bf16 %v837, %v833
    %v854 = vpack.c.bf16 %v838, %v834
    %v855 = vld [vmem:[%s7] sm:$0xf]
    %v856 = vld [vmem:[%s7 + $0x4] sm:$0xf]
    %v857 = vld [vmem:[%s7 + $0x8] sm:$0xf]
    %v858 = vld [vmem:[%s7 + $0xc] sm:$0xf]
    %v859 = vld [vmem:[%s7 + $0x10] sm:$0xf]
    %v860 = vld [vmem:[%s7 + $0x14] sm:$0xf]
    %v861 = vld [vmem:[%s7 + $0x18] sm:$0xf]
    %v862 = vld [vmem:[%s7 + $0x1c] sm:$0xf]
    %v863 = vld [vmem:[%s7 + $0x20] sm:$0xf]
    %v864 = vld [vmem:[%s7 + $0x24] sm:$0xf]
    %v865 = vld [vmem:[%s7 + $0x28] sm:$0xf]
    %v866 = vld [vmem:[%s7 + $0x2c] sm:$0xf]
    %v867 = vld [vmem:[%s7 + $0x30] sm:$0xf]
    %v868 = vld [vmem:[%s7 + $0x34] sm:$0xf]
    %v869 = vld [vmem:[%s7 + $0x38] sm:$0xf]
    %v870 = vld [vmem:[%s7 + $0x3c] sm:$0xf]
    %v871 = vld [vmem:[%s7 + $0x40] sm:$0xf]
    %v872 = vld [vmem:[%s7 + $0x44] sm:$0xf]
    %v873 = vld [vmem:[%s7 + $0x48] sm:$0xf]
    %v874 = vld [vmem:[%s7 + $0x4c] sm:$0xf]
    %v875 = vld [vmem:[%s7 + $0x50] sm:$0xf]
    %v876 = vld [vmem:[%s7 + $0x54] sm:$0xf]
    %v877 = vld [vmem:[%s7 + $0x58] sm:$0xf]
    %v878 = vld [vmem:[%s7 + $0x5c] sm:$0xf]
    %v879 = vld [vmem:[%s7 + $0x60] sm:$0xf]
    %v880 = vld [vmem:[%s7 + $0x64] sm:$0xf]
    %v881 = vld [vmem:[%s7 + $0x68] sm:$0xf]
    %v882 = vld [vmem:[%s7 + $0x6c] sm:$0xf]
    %v883 = vld [vmem:[%s7 + $0x70] sm:$0xf]
    %v884 = vld [vmem:[%s7 + $0x74] sm:$0xf]
    %v885 = vld [vmem:[%s7 + $0x78] sm:$0xf]
    %v886 = vld [vmem:[%s7 + $0x7c] sm:$0xf]
    %v887 = vld [vmem:[%s7 + $0x80] sm:$0xf]
    %v888 = vld [vmem:[%s7 + $0x84] sm:$0xf]
    %v889 = vld [vmem:[%s7 + $0x88] sm:$0xf]
    %v890 = vld [vmem:[%s7 + $0x8c] sm:$0xf]
    %v891 = vld [vmem:[%s7 + $0x90] sm:$0xf]
    %v892 = vld [vmem:[%s7 + $0x94] sm:$0xf]
    %v893 = vld [vmem:[%s7 + $0x98] sm:$0xf]
    %v894 = vld [vmem:[%s7 + $0x9c] sm:$0xf]
    %v895 = vld [vmem:[%s7 + $0xa0] sm:$0xf]
    %v896 = vld [vmem:[%s7 + $0xa4] sm:$0xf]
    %v897 = vld [vmem:[%s7 + $0xa8] sm:$0xf]
    %v898 = vld [vmem:[%s7 + $0xac] sm:$0xf]
    %v899 = vld [vmem:[%s7 + $0xb0] sm:$0xf]
    %v900 = vld [vmem:[%s7 + $0xb4] sm:$0xf]
    %v901 = vld [vmem:[%s7 + $0xb8] sm:$0xf]
    %v902 = vld [vmem:[%s7 + $0xbc] sm:$0xf]
    %v903 = vld [vmem:[%s7 + $0xc0] sm:$0xf]
    %v904 = vld [vmem:[%s7 + $0xc4] sm:$0xf]
    %v905 = vld [vmem:[%s7 + $0xc8] sm:$0xf]
    %v906 = vld [vmem:[%s7 + $0xcc] sm:$0xf]
    %v907 = vld [vmem:[%s7 + $0xd0] sm:$0xf]
    %v908 = vld [vmem:[%s7 + $0xd4] sm:$0xf]
    %v909 = vld [vmem:[%s7 + $0xd8] sm:$0xf]
    %v910 = vld [vmem:[%s7 + $0xdc] sm:$0xf]
    %v911 = vld [vmem:[%s7 + $0xe0] sm:$0xf]
    %v912 = vld [vmem:[%s7 + $0xe4] sm:$0xf]
    %v913 = vld [vmem:[%s7 + $0xe8] sm:$0xf]
    %v914 = vld [vmem:[%s7 + $0xec] sm:$0xf]
    %v915 = vld [vmem:[%s7 + $0xf0] sm:$0xf]
    %v916 = vld [vmem:[%s7 + $0xf4] sm:$0xf]
    %v917 = vld [vmem:[%s7 + $0xf8] sm:$0xf]
    %v918 = vld [vmem:[%s7 + $0xfc] sm:$0xf]
    %v919 = vld [vmem:[%s8] sm:$0x1]
    %v921 = vperm.slane %v919, 0
    %v987 = vunpack.c.l.b16 %v855
    %v988 = vunpack.c.l.b16 %v856
    %v989 = vunpack.c.l.b16 %v857
    %v990 = vunpack.c.l.b16 %v858
    %v991 = vunpack.c.l.b16 %v859
    %v992 = vunpack.c.l.b16 %v860
    %v993 = vunpack.c.l.b16 %v861
    %v994 = vunpack.c.l.b16 %v862
    %v995 = vunpack.c.l.b16 %v863
    %v996 = vunpack.c.l.b16 %v864
    %v997 = vunpack.c.l.b16 %v865
    %v998 = vunpack.c.l.b16 %v866
    %v999 = vunpack.c.l.b16 %v867
    %v1000 = vunpack.c.l.b16 %v868
    %v1001 = vunpack.c.l.b16 %v869
    %v1002 = vunpack.c.l.b16 %v870
    %v1003 = vunpack.c.l.b16 %v871
    %v1004 = vunpack.c.l.b16 %v872
    %v1005 = vunpack.c.l.b16 %v873
    %v1006 = vunpack.c.l.b16 %v874
    %v1007 = vunpack.c.l.b16 %v875
    %v1008 = vunpack.c.l.b16 %v876
    %v1009 = vunpack.c.l.b16 %v877
    %v1010 = vunpack.c.l.b16 %v878
    %v1011 = vunpack.c.l.b16 %v879
    %v1012 = vunpack.c.l.b16 %v880
    %v1013 = vunpack.c.l.b16 %v881
    %v1014 = vunpack.c.l.b16 %v882
    %v1015 = vunpack.c.l.b16 %v883
    %v1016 = vunpack.c.l.b16 %v884
    %v1017 = vunpack.c.l.b16 %v885
    %v1018 = vunpack.c.l.b16 %v886
    %v1019 = vunpack.c.l.b16 %v887
    %v1020 = vunpack.c.l.b16 %v888
    %v1021 = vunpack.c.l.b16 %v889
    %v1022 = vunpack.c.l.b16 %v890
    %v1023 = vunpack.c.l.b16 %v891
    %v1024 = vunpack.c.l.b16 %v892
    %v1025 = vunpack.c.l.b16 %v893
    %v1026 = vunpack.c.l.b16 %v894
    %v1027 = vunpack.c.l.b16 %v895
    %v1028 = vunpack.c.l.b16 %v896
    %v1029 = vunpack.c.l.b16 %v897
    %v1030 = vunpack.c.l.b16 %v898
    %v1031 = vunpack.c.l.b16 %v899
    %v1032 = vunpack.c.l.b16 %v900
    %v1033 = vunpack.c.l.b16 %v901
    %v1034 = vunpack.c.l.b16 %v902
    %v1035 = vunpack.c.l.b16 %v903
    %v1036 = vunpack.c.l.b16 %v904
    %v1037 = vunpack.c.l.b16 %v905
    %v1038 = vunpack.c.l.b16 %v906
    %v1039 = vunpack.c.l.b16 %v907
    %v1040 = vunpack.c.l.b16 %v908
    %v1041 = vunpack.c.l.b16 %v909
    %v1042 = vunpack.c.l.b16 %v910
    %v1043 = vunpack.c.l.b16 %v911
    %v1044 = vunpack.c.l.b16 %v912
    %v1045 = vunpack.c.l.b16 %v913
    %v1046 = vunpack.c.l.b16 %v914
    %v1047 = vunpack.c.l.b16 %v915
    %v1048 = vunpack.c.l.b16 %v916
    %v1049 = vunpack.c.l.b16 %v917
    %v1050 = vunpack.c.l.b16 %v918
    %v1051 = vpack.c.b16 %v988, %v987
    %v1052 = vpack.c.b16 %v990, %v989
    %v1053 = vpack.c.b16 %v992, %v991
    %v1054 = vpack.c.b16 %v994, %v993
    %v1055 = vpack.c.b16 %v996, %v995
    %v1056 = vpack.c.b16 %v998, %v997
    %v1057 = vpack.c.b16 %v1000, %v999
    %v1058 = vpack.c.b16 %v1002, %v1001
    %v1059 = vpack.c.b16 %v1004, %v1003
    %v1060 = vpack.c.b16 %v1006, %v1005
    %v1061 = vpack.c.b16 %v1008, %v1007
    %v1062 = vpack.c.b16 %v1010, %v1009
    %v1063 = vpack.c.b16 %v1012, %v1011
    %v1064 = vpack.c.b16 %v1014, %v1013
    %v1065 = vpack.c.b16 %v1016, %v1015
    %v1066 = vpack.c.b16 %v1018, %v1017
    %v1067 = vpack.c.b16 %v1020, %v1019
    %v1068 = vpack.c.b16 %v1022, %v1021
    %v1069 = vpack.c.b16 %v1024, %v1023
    %v1070 = vpack.c.b16 %v1026, %v1025
    %v1071 = vpack.c.b16 %v1028, %v1027
    %v1072 = vpack.c.b16 %v1030, %v1029
    %v1073 = vpack.c.b16 %v1032, %v1031
    %v1074 = vpack.c.b16 %v1034, %v1033
    %v1075 = vpack.c.b16 %v1036, %v1035
    %v1076 = vpack.c.b16 %v1038, %v1037
    %v1077 = vpack.c.b16 %v1040, %v1039
    %v1078 = vpack.c.b16 %v1042, %v1041
    %v1079 = vpack.c.b16 %v1044, %v1043
    %v1080 = vpack.c.b16 %v1046, %v1045
    %v1081 = vpack.c.b16 %v1048, %v1047
    %v1082 = vpack.c.b16 %v1050, %v1049
    %1115 = vmatpush.bf16.msra.mxu0 %v1058
    %1116 = vmatpush.bf16.msra.mxu0 %v1057
    %1117 = vmatpush.bf16.msra.mxu0 %v1056
    %1118 = vmatpush.bf16.msra.mxu0 %v1055
    %1119 = vmatpush.bf16.msra.mxu0 %v1054
    %1120 = vmatpush.bf16.msra.mxu0 %v1053
    %1121 = vmatpush.bf16.msra.mxu0 %v1052
    %1122 = vmatpush.bf16.msra.mxu0 %v1051
    %1123 = vmatmul.bf16.gmra.mxu0 %v839
    %v1124 = vpop.f32.mrf.mxu0
    %v1125 = vadd.f32 %v921, %v1124
    %v1126 = vpop.f32.mrf.mxu0
    %v1127 = vadd.f32 %v921, %v1126
    %1128 = vmatmul.bf16.gmra.mxu0 %v843
    %v1129 = vpop.f32.mrf.mxu0
    %v1130 = vadd.f32 %v921, %v1129
    %v1131 = vpop.f32.mrf.mxu0
    %v1132 = vadd.f32 %v921, %v1131
    %1133 = vmatmul.bf16.gmra.mxu0 %v847
    %v1134 = vpop.f32.mrf.mxu0
    %v1135 = vadd.f32 %v921, %v1134
    %v1136 = vpop.f32.mrf.mxu0
    %v1137 = vadd.f32 %v921, %v1136
    %1138 = vmatmul.bf16.gmra.mxu0 %v851
    %v1139 = vpop.f32.mrf.mxu0
    %v1140 = vadd.f32 %v921, %v1139
    %v1141 = vpop.f32.mrf.mxu0
    %v1142 = vadd.f32 %v921, %v1141
    %1143 = vdwg.mxu0
    %1144 = vmatpush.bf16.msra.mxu0 %v1066
    %1145 = vmatpush.bf16.msra.mxu0 %v1065
    %1146 = vmatpush.bf16.msra.mxu0 %v1064
    %1147 = vmatpush.bf16.msra.mxu0 %v1063
    %1148 = vmatpush.bf16.msra.mxu0 %v1062
    %1149 = vmatpush.bf16.msra.mxu0 %v1061
    %1150 = vmatpush.bf16.msra.mxu0 %v1060
    %1151 = vmatpush.bf16.msra.mxu0 %v1059
    %1152 = vmatmul.bf16.gmra.mxu0 %v840
    %v1153 = vpop.f32.mrf.mxu0
    %v1154 = vadd.f32 %v1125, %v1153
    %v1155 = vpop.f32.mrf.mxu0
    %v1156 = vadd.f32 %v1127, %v1155
    %1157 = vmatmul.bf16.gmra.mxu0 %v844
    %v1158 = vpop.f32.mrf.mxu0
    %v1159 = vadd.f32 %v1130, %v1158
    %v1160 = vpop.f32.mrf.mxu0
    %v1161 = vadd.f32 %v1132, %v1160
    %1162 = vmatmul.bf16.gmra.mxu0 %v848
    %v1163 = vpop.f32.mrf.mxu0
    %v1164 = vadd.f32 %v1135, %v1163
    %v1165 = vpop.f32.mrf.mxu0
    %v1166 = vadd.f32 %v1137, %v1165
    %1167 = vmatmul.bf16.gmra.mxu0 %v852
    %v1168 = vpop.f32.mrf.mxu0
    %v1169 = vadd.f32 %v1140, %v1168
    %v1170 = vpop.f32.mrf.mxu0
    %v1171 = vadd.f32 %v1142, %v1170
    %1172 = vdwg.mxu0
    %1173 = vmatpush.bf16.msra.mxu0 %v1074
    %1174 = vmatpush.bf16.msra.mxu0 %v1073
    %1175 = vmatpush.bf16.msra.mxu0 %v1072
    %1176 = vmatpush.bf16.msra.mxu0 %v1071
    %1177 = vmatpush.bf16.msra.mxu0 %v1070
    %1178 = vmatpush.bf16.msra.mxu0 %v1069
    %1179 = vmatpush.bf16.msra.mxu0 %v1068
    %1180 = vmatpush.bf16.msra.mxu0 %v1067
    %1181 = vmatmul.bf16.gmra.mxu0 %v841
    %v1182 = vpop.f32.mrf.mxu0
    %v1183 = vadd.f32 %v1154, %v1182
    %v1184 = vpop.f32.mrf.mxu0
    %v1185 = vadd.f32 %v1156, %v1184
    %1186 = vmatmul.bf16.gmra.mxu0 %v845
    %v1187 = vpop.f32.mrf.mxu0
    %v1188 = vadd.f32 %v1159, %v1187
    %v1189 = vpop.f32.mrf.mxu0
    %v1190 = vadd.f32 %v1161, %v1189
    %1191 = vmatmul.bf16.gmra.mxu0 %v849
    %v1192 = vpop.f32.mrf.mxu0
    %v1193 = vadd.f32 %v1164, %v1192
    %v1194 = vpop.f32.mrf.mxu0
    %v1195 = vadd.f32 %v1166, %v1194
    %1196 = vmatmul.bf16.gmra.mxu0 %v853
    %v1197 = vpop.f32.mrf.mxu0
    %v1198 = vadd.f32 %v1169, %v1197
    %v1199 = vpop.f32.mrf.mxu0
    %v1200 = vadd.f32 %v1171, %v1199
    %1201 = vdwg.mxu0
    %1202 = vmatpush.bf16.msra.mxu0 %v1082
    %1203 = vmatpush.bf16.msra.mxu0 %v1081
    %1204 = vmatpush.bf16.msra.mxu0 %v1080
    %1205 = vmatpush.bf16.msra.mxu0 %v1079
    %1206 = vmatpush.bf16.msra.mxu0 %v1078
    %1207 = vmatpush.bf16.msra.mxu0 %v1077
    %1208 = vmatpush.bf16.msra.mxu0 %v1076
    %1209 = vmatpush.bf16.msra.mxu0 %v1075
    %1210 = vmatmul.bf16.gmra.mxu0 %v842
    %v1211 = vpop.f32.mrf.mxu0
    %v1212 = vadd.f32 %v1183, %v1211
    %v1213 = vpop.f32.mrf.mxu0
    %v1214 = vadd.f32 %v1185, %v1213
    %1215 = vmatmul.bf16.gmra.mxu0 %v846
    %v1216 = vpop.f32.mrf.mxu0
    %v1217 = vadd.f32 %v1188, %v1216
    %v1218 = vpop.f32.mrf.mxu0
    %v1219 = vadd.f32 %v1190, %v1218
    %1220 = vmatmul.bf16.gmra.mxu0 %v850
    %v1221 = vpop.f32.mrf.mxu0
    %v1222 = vadd.f32 %v1193, %v1221
    %v1223 = vpop.f32.mrf.mxu0
    %v1224 = vadd.f32 %v1195, %v1223
    %1225 = vmatmul.bf16.gmra.mxu0 %v854
    %v1226 = vpop.f32.mrf.mxu0
    %v1227 = vadd.f32 %v1198, %v1226
    %v1228 = vpop.f32.mrf.mxu0
    %v1229 = vadd.f32 %v1200, %v1228
    %1230 = vdwg.mxu0
    %v1231 = vadd.f32 %v221, %v1212
    %v1232 = vadd.f32 %v222, %v1214
    %v1233 = vadd.f32 %v223, %v1217
    %v1234 = vadd.f32 %v224, %v1219
    %v1235 = vadd.f32 %v225, %v1222
    %v1236 = vadd.f32 %v226, %v1224
    %v1237 = vadd.f32 %v227, %v1227
    %v1238 = vadd.f32 %v228, %v1229
    %v1239 = vld [vmem:[%s9] sm:$0x1]
    %v1240 = vld [vmem:[%s10] sm:$0x1]
    %v1241 = vadd.f32 %v1231, %v1232
    %v1242 = vadd.f32 %v1241, %v1233
    %v1243 = vadd.f32 %v1242, %v1234
    %v1244 = vadd.f32 %v1243, %v1235
    %v1245 = vadd.f32 %v1244, %v1236
    %v1246 = vadd.f32 %v1245, %v1237
    %v1247 = vadd.f32 %v1246, %v1238
    %v1248 = vrot.slane %v1247, 4
    %v1249 = vadd.f32 %v1247, %v1248
    %v1250 = vrot.slane %v1249, 2
    %v1251 = vadd.f32 %v1249, %v1250
    %v1252 = vrot.slane %v1251, 1
    %v1253 = vadd.f32 %v1251, %v1252
    %v1254 = vmul.f32 %v1253, %v156
    %v1255 = vsub.f32 %v1231, %v1254
    %v1256 = vsub.f32 %v1232, %v1254
    %v1257 = vsub.f32 %v1233, %v1254
    %v1258 = vsub.f32 %v1234, %v1254
    %v1259 = vsub.f32 %v1235, %v1254
    %v1260 = vsub.f32 %v1236, %v1254
    %v1261 = vsub.f32 %v1237, %v1254
    %v1262 = vsub.f32 %v1238, %v1254
    %v1263 = vmul.f32 %v1255, %v1255
    %v1264 = vmul.f32 %v1256, %v1256
    %v1265 = vmul.f32 %v1257, %v1257
    %v1266 = vmul.f32 %v1258, %v1258
    %v1267 = vmul.f32 %v1259, %v1259
    %v1268 = vmul.f32 %v1260, %v1260
    %v1269 = vmul.f32 %v1261, %v1261
    %v1270 = vmul.f32 %v1262, %v1262
    %v1271 = vadd.f32 %v1263, %v1264
    %v1272 = vadd.f32 %v1271, %v1265
    %v1273 = vadd.f32 %v1272, %v1266
    %v1274 = vadd.f32 %v1273, %v1267
    %v1275 = vadd.f32 %v1274, %v1268
    %v1276 = vadd.f32 %v1275, %v1269
    %v1277 = vadd.f32 %v1276, %v1270
    %v1278 = vrot.slane %v1277, 4
    %v1279 = vadd.f32 %v1277, %v1278
    %v1280 = vrot.slane %v1279, 2
    %v1281 = vadd.f32 %v1279, %v1280
    %v1282 = vrot.slane %v1281, 1
    %v1283 = vadd.f32 %v1281, %v1282
    %v1284 = vmul.f32 %v1283, %v156
    %v1285 = vadd.f32 %v1284, 1e-05
    %v1286 = vrsqrt.pop %v1285
    %v1287 = vmul.f32 %v1286, %v1285
    %v1288 = vmul.f32 %v1287, %v1286
    %v1289 = vmul.f32 0.5, %v1288
    %v1290 = vsub.f32 1.5, %v1289
    %v1291 = vmul.f32 %v1286, %v1290
    %vm1292 = vweird.f32 %v1285
    %vm1293 = vweird.f32 %v1286
    %vm1294 = vmor %vm1292, %vm1293
    %v1295 = vsel %vm1294, %v1286, %v1291
    %v1296 = vmul.f32 %v1255, %v1295
    %v1297 = vmul.f32 %v1256, %v1295
    %v1298 = vmul.f32 %v1257, %v1295
    %v1299 = vmul.f32 %v1258, %v1295
    %v1300 = vmul.f32 %v1259, %v1295
    %v1301 = vmul.f32 %v1260, %v1295
    %v1302 = vmul.f32 %v1261, %v1295
    %v1303 = vmul.f32 %v1262, %v1295
    %v1305 = vperm.slane %v1239, 0
    %v1307 = vmul.f32 %v1296, %v1305
    %v1308 = vmul.f32 %v1297, %v1305
    %v1309 = vmul.f32 %v1298, %v1305
    %v1310 = vmul.f32 %v1299, %v1305
    %v1311 = vmul.f32 %v1300, %v1305
    %v1312 = vmul.f32 %v1301, %v1305
    %v1313 = vmul.f32 %v1302, %v1305
    %v1314 = vmul.f32 %v1303, %v1305
    %v1316 = vperm.slane %v1240, 0
    %v1318 = vadd.f32 %v1307, %v1316
    %v1319 = vadd.f32 %v1308, %v1316
    %v1320 = vadd.f32 %v1309, %v1316
    %v1321 = vadd.f32 %v1310, %v1316
    %v1322 = vadd.f32 %v1311, %v1316
    %v1323 = vadd.f32 %v1312, %v1316
    %v1324 = vadd.f32 %v1313, %v1316
    %v1325 = vadd.f32 %v1314, %v1316
    %1326 = vst [vmem:[#allocation3] sm:$0xff] %v1318
    %1327 = vst [vmem:[#allocation3 + $0x8] sm:$0xff] %v1319
    %1328 = vst [vmem:[#allocation3 + $0x10] sm:$0xff] %v1320
    %1329 = vst [vmem:[#allocation3 + $0x18] sm:$0xff] %v1321
    %1330 = vst [vmem:[#allocation3 + $0x20] sm:$0xff] %v1322
    %1331 = vst [vmem:[#allocation3 + $0x28] sm:$0xff] %v1323
    %1332 = vst [vmem:[#allocation3 + $0x30] sm:$0xff] %v1324
    %1333 = vst [vmem:[#allocation3 + $0x38] sm:$0xff] %v1325
    // Predicated region
    $region46: #{_lambda_.3} parent=1 // pred_check
      _
    $region47: #{_lambda_.3} parent=1 // pred_check_branch
      %1335 = sbr.rel (0) target = $region49
    $region48: #{_lambda_.3} parent=1 // pred_region
      %1337 = vsyncadd [#allocation4], 0
      %s1338 = sshll.u32 [#allocation3], 4
      %s1339 = int_to_ptr.vmem [resolvable:$true] %s1338
      %s1340 = sshll.u32 %s11, 4
      %s1341 = int_to_ptr.hbm [resolvable:$true] %s1340
      %1346 = dma.vmem_to_hbm [thread:$0]  %s1339, 1024, %s1341, [#allocation4], 128, 128, 8
    $region49: #{_lambda_.3} parent=1 // pred_fallthru
      _
    // Predicated region
    $region50: #{_lambda_.3} parent=1 // pred_check
      _
    $region51: #{_lambda_.3} parent=1 // pred_check_branch
      %1348 = sbr.rel (0) target = $region53
    $region52: #{_lambda_.3} parent=1 // pred_region
      %1350 = dma.done [#allocation4], 1024
    $region53: #{_lambda_.3} parent=1 // pred_fallthru
      _
    %1351 = vsyncpa [#allocation4], 1

</llo_original>
